<compile_context>
chip_gen: v7x
topology: tpu7x:2x2x1
jax: 0.10.0
libtpu: 0.0.40
codegen_flags: <defaults>
</compile_context>

<pallas_src>
import jax
import jax.numpy as jnp
from jax.experimental import pallas as pl
from jax.experimental.pallas import tpu as pltpu


def _se_conv1x1_kernel(x_ref, g_ref, w_ref, o_ref):
    # x_ref: (1, Cin, HW), g_ref: (1, 1, Cin), w_ref: (Cout, Cin),
    # o_ref: (1, Cout, HW)
    g = jax.nn.sigmoid(g_ref[0])                 # (1, Cin), lane-aligned
    # Fold the per-channel gate into the weight (lane-axis broadcast on VPU);
    # mathematically identical to gating x, but avoids a sublane broadcast.
    wg = w_ref[...] * g                          # (Cout, Cin)
    # 1x1 conv == (Cout, Cin) @ (Cin, HW) on the MXU, f32 accumulation.
    o_ref[0] = jnp.dot(
        wg, x_ref[0], preferred_element_type=jnp.float32
    ).astype(o_ref.dtype)


def sigmoid_mul_conv2d(x_nchw, gate_nc11, weight_oi11):
    """out = Conv2d_1x1(sigmoid(gate) * x), inputs/outputs in PyTorch NCHW."""
    N, C, H, W = x_nchw.shape
    Cout = weight_oi11.shape[0]
    HW = H * W

    # Native-layout views: contiguous reshapes only, no transposes.
    x = x_nchw.reshape(N, C, HW)                 # (N, Cin, HW)
    g = gate_nc11.reshape(N, 1, C)               # (N, 1, Cin)  lane-major gate
    w = weight_oi11.reshape(Cout, C)             # (Cout, Cin)

    itemsize = jnp.dtype(x_nchw.dtype).itemsize
    cost = pl.CostEstimate(
        flops=2 * N * Cout * C * HW,
        transcendentals=N * C,                   # sigmoid
        bytes_accessed=itemsize * (N * C * HW + N * C + Cout * C + N * Cout * HW),
    )

    # NOTE(correctness): kernel dot and the reference einsum both run at
    # default matmul precision; if a hard <=1e-4 tolerance is required across
    # TPU generations, pin precision (e.g. HIGHEST) on both sides.
    out = pl.pallas_call(
        _se_conv1x1_kernel,
        out_shape=jax.ShapeDtypeStruct((N, Cout, HW), x_nchw.dtype),
        grid_spec=pl.GridSpec(
            grid=(N,),
            in_specs=[
                pl.BlockSpec((1, C, HW), lambda n: (n, 0, 0)),
                pl.BlockSpec((1, 1, C), lambda n: (n, 0, 0)),
                # Constant index_map -> weight stays VMEM-resident across N.
                pl.BlockSpec((Cout, C), lambda n: (0, 0)),
            ],
            out_specs=pl.BlockSpec((1, Cout, HW), lambda n: (n, 0, 0)),
        ),
        compiler_params=pltpu.CompilerParams(
            dimension_semantics=("parallel",),
        ),
        cost_estimate=cost,
    )(x, g, w)

    # (N, Cout, HW) -> NCHW: free reshape, no transpose needed.
    return out.reshape(N, Cout, H, W)


if __name__ == "__main__":
    key = jax.random.PRNGKey(0)
    k1, k2, k3 = jax.random.split(key, 3)

    # Shapes implied by the module: Conv2d(960, 160, 1x1), SE gate over 960 ch.
    N, Cin, H, W, Cout = 1, 960, 14, 14, 160
    x275 = jax.random.normal(k1, (N, Cin, H, W), dtype=jnp.float32)
    x279 = jax.random.normal(k2, (N, Cin, 1, 1), dtype=jnp.float32)
    # Deterministic conv weight init (kaiming-uniform-like scale).
    bound = 1.0 / (Cin ** 0.5)
    w_conv = jax.random.uniform(
        k3, (Cout, Cin, 1, 1), dtype=jnp.float32, minval=-bound, maxval=bound
    )

    out = sigmoid_mul_conv2d(x275, x279, w_conv)
    out = jax.block_until_ready(out)

    # Reference check (plain JAX).
    gated = jax.nn.sigmoid(x279) * x275
    ref = jnp.einsum("nchw,oc->nohw", gated, w_conv.reshape(Cout, Cin))
    assert out.shape == (N, Cout, H, W)
    assert jnp.allclose(out, ref, atol=1e-4, rtol=1e-4)

    print("KERNEL_OK")
</pallas_src>

<mosaic_0001>
module attributes {stable_mosaic.version = 11 : i64} {
  func.func @_se_conv1x1_kernel(%arg0: i32, %arg1: memref<1x960x196xf32, #tpu.memory_space<vmem>>, %arg2: memref<1x1x960xf32, #tpu.memory_space<vmem>>, %arg3: memref<160x960xf32, #tpu.memory_space<vmem>>, %arg4: memref<1x160x196xf32, #tpu.memory_space<vmem>>) attributes {dimension_semantics = [#tpu.dimension_semantics<parallel>], iteration_bounds = array<i64: 1>, scalar_prefetch = 0 : i64, scratch_operands = 0 : i64, tpu.core_type = #tpu.core_type<tc>, window_params = [{transform_indices = @transform_0, window_bounds = array<i64: 1, 960, 196>}, {transform_indices = @transform_1, window_bounds = array<i64: 1, 1, 960>}, {pipeline_mode = #tpu.pipeline_mode<synchronous>, transform_indices = @transform_2, window_bounds = array<i64: 160, 960>}, {transform_indices = @transform_3, window_bounds = array<i64: 1, 160, 196>}]} {
    %c0 = arith.constant 0 : index
    %c0_0 = arith.constant 0 : index
    %c0_1 = arith.constant 0 : index
    %0 = vector.load %arg2[%c0, %c0_0, %c0_1] : memref<1x1x960xf32, #tpu.memory_space<vmem>>, vector<1x1x960xf32>
    %1 = vector.shape_cast %0 : vector<1x1x960xf32> to vector<1x960xf32>
    %2 = arith.negf %1 : vector<1x960xf32>
    %3 = math.exp %2 : vector<1x960xf32>
    %cst = arith.constant 1.000000e+00 : f32
    %4 = vector.broadcast %cst : f32 to vector<1x960xf32>
    %5 = arith.addf %4, %3 : vector<1x960xf32>
    %6 = arith.divf %4, %5 : vector<1x960xf32>
    %c0_2 = arith.constant 0 : index
    %c0_3 = arith.constant 0 : index
    %7 = vector.load %arg3[%c0_2, %c0_3] : memref<160x960xf32, #tpu.memory_space<vmem>>, vector<160x960xf32>
    %8 = vector.broadcast %6 : vector<1x960xf32> to vector<160x960xf32>
    %9 = arith.mulf %7, %8 : vector<160x960xf32>
    %c0_4 = arith.constant 0 : index
    %c0_5 = arith.constant 0 : index
    %c0_6 = arith.constant 0 : index
    %10 = vector.load %arg1[%c0_4, %c0_5, %c0_6] : memref<1x960x196xf32, #tpu.memory_space<vmem>>, vector<1x960x196xf32>
    %11 = vector.shape_cast %10 : vector<1x960x196xf32> to vector<960x196xf32>
    %cst_7 = arith.constant dense<0.000000e+00> : vector<160x196xf32>
    %12 = tpu.matmul %9, %11, %cst_7 {dimension_numbers = #tpu.dot_dimension_numbers<[1], [0], [0], [1], [0, 0, 1, 1], [], []>} : vector<160x960xf32>, vector<960x196xf32>, vector<160x196xf32> -> vector<160x196xf32>
    %c0_8 = arith.constant 0 : index
    %c0_9 = arith.constant 0 : index
    %c0_10 = arith.constant 0 : index
    %13 = vector.load %arg4[%c0_8, %c0_9, %c0_10] : memref<1x160x196xf32, #tpu.memory_space<vmem>>, vector<1x160x196xf32>
    %14 = vector.shape_cast %13 : vector<1x160x196xf32> to vector<160x196xf32>
    %15 = vector.shape_cast %12 : vector<160x196xf32> to vector<1x160x196xf32>
    tpu.vector_store %arg4[%c0_8, %c0_9, %c0_10], %15 {strides = array<i32>} : memref<1x160x196xf32, #tpu.memory_space<vmem>>, vector<1x160x196xf32>,
    return
  }
  func.func @transform_0(%arg0: i32) -> (i32, i32, i32) {
    %c0_i32 = arith.constant 0 : i32
    %c0_i32_0 = arith.constant 0 : i32
    %c0_i32_1 = arith.constant 0 : i32
    return %arg0, %c0_i32, %c0_i32_0 : i32, i32, i32
  }
  func.func @transform_1(%arg0: i32) -> (i32, i32, i32) {
    %c0_i32 = arith.constant 0 : i32
    %c0_i32_0 = arith.constant 0 : i32
    %c0_i32_1 = arith.constant 0 : i32
    return %arg0, %c0_i32, %c0_i32_0 : i32, i32, i32
  }
  func.func @transform_2(%arg0: i32) -> (i32, i32) {
    %c0_i32 = arith.constant 0 : i32
    %c0_i32_0 = arith.constant 0 : i32
    %c0_i32_1 = arith.constant 0 : i32
    return %c0_i32, %c0_i32_0 : i32, i32
  }
  func.func @transform_3(%arg0: i32) -> (i32, i32, i32) {
    %c0_i32 = arith.constant 0 : i32
    %c0_i32_0 = arith.constant 0 : i32
    %c0_i32_1 = arith.constant 0 : i32
    return %arg0, %c0_i32, %c0_i32_0 : i32, i32, i32
  }
}

</mosaic_0001>

<llo_original>
// kernel: tpu_custom_call.1
$region0: #{tpu_custom_call.1}
  #allocation0 [shape = 'u32[]', space=smem, size = 0x4, offset = 0x4, fixed_abs, tag = 'smem constant byte address 0x4 - core index']
  #allocation1 [shape = 'u32[144,128]{1,0:T(1,128)}', space=vmem, size = 0x12000, scoped, tag = 'internal scratch']
  %s0 = inlined_call_operand.vmem [shape: f32[1,960,196], index: 0, kind: input, shape index: {}]
  %s1 = inlined_call_operand.vmem [shape: f32[1,1,960], index: 1, kind: input, shape index: {}]
  %s2 = inlined_call_operand.vmem [shape: f32[160,960], index: 2, kind: input, shape index: {}]
  %s3 = inlined_call_operand.hbm [shape: f32[1,160,196], index: 3, kind: output, shape index: {}]
  %s4 = sld [smem:[#allocation0]]
  $region22: #{tpu_custom_call.1} parent=0
    _
  %s6 = ssub.s32 1, %s4
  %s7 = scalar_select 0, %s6, %s4
  $region1: #{tpu_custom_call.1} parent=0
    #allocation2 [shape = 'u8[163840]{0}', space=vmem, size = 0x28000, scoped, tag = 'output window, operand 0, single buffered']
    #allocation3 [shape = 's32[1]{0}', space=sflag, size = 0x4, scoped, tag = 'scoped memory for tpu_custom_call.1']
    %8 = vsyncpa [#allocation3], 0
    // Predicated region
    $region2: #{tpu_custom_call.1} parent=1 // pred_check
      _
    $region3: #{tpu_custom_call.1} parent=1 // pred_check_branch
      %10 = sbr.rel (0) target = $region5
    $region4: #{tpu_custom_call.1} parent=1 // pred_region
      _
    $region5: #{tpu_custom_call.1} parent=1 // pred_fallthru
      _
    // Predicated region
    $region6: #{tpu_custom_call.1} parent=1 // pred_check
      _
    $region7: #{tpu_custom_call.1} parent=1 // pred_check_branch
      %12 = sbr.rel (0) target = $region9
    $region8: #{tpu_custom_call.1} parent=1 // pred_region
      _
    $region9: #{tpu_custom_call.1} parent=1 // pred_fallthru
      _
    // Predicated region
    $region10: #{tpu_custom_call.1} parent=1 // pred_check
      _
    $region11: #{tpu_custom_call.1} parent=1 // pred_check_branch
      %14 = sbr.rel (0) target = $region13
    $region12: #{tpu_custom_call.1} parent=1 // pred_region
      _
    $region13: #{tpu_custom_call.1} parent=1 // pred_fallthru
      _
    %v15 = vld [vmem:[%s1] sm:$0xff]
    %v16 = vxor.u32 %v15, 2147483648
    %v17 = vmul.f32 %v16, 1.442695
    %v18 = vpow.pop %v17
    %v19 = vadd.f32 %v18, 1.0
    %v20 = vrcp.pop %v19
    %v21 = vmul.f32 1.0, %v20
    %v22 = vld [vmem:[%s2] sm:$0xff]
    %v23 = vld [vmem:[%s2 + $0x8] sm:$0xff]
    %v24 = vld [vmem:[%s2 + $0x10] sm:$0xff]
    %v25 = vld [vmem:[%s2 + $0x18] sm:$0xff]
    %v26 = vld [vmem:[%s2 + $0x20] sm:$0xff]
    %v27 = vld [vmem:[%s2 + $0x28] sm:$0xff]
    %v28 = vld [vmem:[%s2 + $0x30] sm:$0xff]
    %v29 = vld [vmem:[%s2 + $0x38] sm:$0xff]
    %v30 = vld [vmem:[%s2 + $0x40] sm:$0xff]
    %v31 = vld [vmem:[%s2 + $0x48] sm:$0xff]
    %v32 = vld [vmem:[%s2 + $0x50] sm:$0xff]
    %v33 = vld [vmem:[%s2 + $0x58] sm:$0xff]
    %v34 = vld [vmem:[%s2 + $0x60] sm:$0xff]
    %v35 = vld [vmem:[%s2 + $0x68] sm:$0xff]
    %v36 = vld [vmem:[%s2 + $0x70] sm:$0xff]
    %v37 = vld [vmem:[%s2 + $0x78] sm:$0xff]
    %v38 = vld [vmem:[%s2 + $0x80] sm:$0xff]
    %v39 = vld [vmem:[%s2 + $0x88] sm:$0xff]
    %v40 = vld [vmem:[%s2 + $0x90] sm:$0xff]
    %v41 = vld [vmem:[%s2 + $0x98] sm:$0xff]
    %v42 = vld [vmem:[%s2 + $0xa0] sm:$0xff]
    %v43 = vld [vmem:[%s2 + $0xa8] sm:$0xff]
    %v44 = vld [vmem:[%s2 + $0xb0] sm:$0xff]
    %v45 = vld [vmem:[%s2 + $0xb8] sm:$0xff]
    %v46 = vld [vmem:[%s2 + $0xc0] sm:$0xff]
    %v47 = vld [vmem:[%s2 + $0xc8] sm:$0xff]
    %v48 = vld [vmem:[%s2 + $0xd0] sm:$0xff]
    %v49 = vld [vmem:[%s2 + $0xd8] sm:$0xff]
    %v50 = vld [vmem:[%s2 + $0xe0] sm:$0xff]
    %v51 = vld [vmem:[%s2 + $0xe8] sm:$0xff]
    %v52 = vld [vmem:[%s2 + $0xf0] sm:$0xff]
    %v53 = vld [vmem:[%s2 + $0xf8] sm:$0xff]
    %v54 = vld [vmem:[%s2 + $0x100] sm:$0xff]
    %v55 = vld [vmem:[%s2 + $0x108] sm:$0xff]
    %v56 = vld [vmem:[%s2 + $0x110] sm:$0xff]
    %v57 = vld [vmem:[%s2 + $0x118] sm:$0xff]
    %v58 = vld [vmem:[%s2 + $0x120] sm:$0xff]
    %v59 = vld [vmem:[%s2 + $0x128] sm:$0xff]
    %v60 = vld [vmem:[%s2 + $0x130] sm:$0xff]
    %v61 = vld [vmem:[%s2 + $0x138] sm:$0xff]
    %v62 = vld [vmem:[%s2 + $0x140] sm:$0xff]
    %v63 = vld [vmem:[%s2 + $0x148] sm:$0xff]
    %v64 = vld [vmem:[%s2 + $0x150] sm:$0xff]
    %v65 = vld [vmem:[%s2 + $0x158] sm:$0xff]
    %v66 = vld [vmem:[%s2 + $0x160] sm:$0xff]
    %v67 = vld [vmem:[%s2 + $0x168] sm:$0xff]
    %v68 = vld [vmem:[%s2 + $0x170] sm:$0xff]
    %v69 = vld [vmem:[%s2 + $0x178] sm:$0xff]
    %v70 = vld [vmem:[%s2 + $0x180] sm:$0xff]
    %v71 = vld [vmem:[%s2 + $0x188] sm:$0xff]
    %v72 = vld [vmem:[%s2 + $0x190] sm:$0xff]
    %v73 = vld [vmem:[%s2 + $0x198] sm:$0xff]
    %v74 = vld [vmem:[%s2 + $0x1a0] sm:$0xff]
    %v75 = vld [vmem:[%s2 + $0x1a8] sm:$0xff]
    %v76 = vld [vmem:[%s2 + $0x1b0] sm:$0xff]
    %v77 = vld [vmem:[%s2 + $0x1b8] sm:$0xff]
    %v78 = vld [vmem:[%s2 + $0x1c0] sm:$0xff]
    %v79 = vld [vmem:[%s2 + $0x1c8] sm:$0xff]
    %v80 = vld [vmem:[%s2 + $0x1d0] sm:$0xff]
    %v81 = vld [vmem:[%s2 + $0x1d8] sm:$0xff]
    %v82 = vld [vmem:[%s2 + $0x1e0] sm:$0xff]
    %v83 = vld [vmem:[%s2 + $0x1e8] sm:$0xff]
    %v84 = vld [vmem:[%s2 + $0x1f0] sm:$0xff]
    %v85 = vld [vmem:[%s2 + $0x1f8] sm:$0xff]
    %v86 = vld [vmem:[%s2 + $0x200] sm:$0xff]
    %v87 = vld [vmem:[%s2 + $0x208] sm:$0xff]
    %v88 = vld [vmem:[%s2 + $0x210] sm:$0xff]
    %v89 = vld [vmem:[%s2 + $0x218] sm:$0xff]
    %v90 = vld [vmem:[%s2 + $0x220] sm:$0xff]
    %v91 = vld [vmem:[%s2 + $0x228] sm:$0xff]
    %v92 = vld [vmem:[%s2 + $0x230] sm:$0xff]
    %v93 = vld [vmem:[%s2 + $0x238] sm:$0xff]
    %v94 = vld [vmem:[%s2 + $0x240] sm:$0xff]
    %v95 = vld [vmem:[%s2 + $0x248] sm:$0xff]
    %v96 = vld [vmem:[%s2 + $0x250] sm:$0xff]
    %v97 = vld [vmem:[%s2 + $0x258] sm:$0xff]
    %v98 = vld [vmem:[%s2 + $0x260] sm:$0xff]
    %v99 = vld [vmem:[%s2 + $0x268] sm:$0xff]
    %v100 = vld [vmem:[%s2 + $0x270] sm:$0xff]
    %v101 = vld [vmem:[%s2 + $0x278] sm:$0xff]
    %v102 = vld [vmem:[%s2 + $0x280] sm:$0xff]
    %v103 = vld [vmem:[%s2 + $0x288] sm:$0xff]
    %v104 = vld [vmem:[%s2 + $0x290] sm:$0xff]
    %v105 = vld [vmem:[%s2 + $0x298] sm:$0xff]
    %v106 = vld [vmem:[%s2 + $0x2a0] sm:$0xff]
    %v107 = vld [vmem:[%s2 + $0x2a8] sm:$0xff]
    %v108 = vld [vmem:[%s2 + $0x2b0] sm:$0xff]
    %v109 = vld [vmem:[%s2 + $0x2b8] sm:$0xff]
    %v110 = vld [vmem:[%s2 + $0x2c0] sm:$0xff]
    %v111 = vld [vmem:[%s2 + $0x2c8] sm:$0xff]
    %v112 = vld [vmem:[%s2 + $0x2d0] sm:$0xff]
    %v113 = vld [vmem:[%s2 + $0x2d8] sm:$0xff]
    %v114 = vld [vmem:[%s2 + $0x2e0] sm:$0xff]
    %v115 = vld [vmem:[%s2 + $0x2e8] sm:$0xff]
    %v116 = vld [vmem:[%s2 + $0x2f0] sm:$0xff]
    %v117 = vld [vmem:[%s2 + $0x2f8] sm:$0xff]
    %v118 = vld [vmem:[%s2 + $0x300] sm:$0xff]
    %v119 = vld [vmem:[%s2 + $0x308] sm:$0xff]
    %v120 = vld [vmem:[%s2 + $0x310] sm:$0xff]
    %v121 = vld [vmem:[%s2 + $0x318] sm:$0xff]
    %v122 = vld [vmem:[%s2 + $0x320] sm:$0xff]
    %v123 = vld [vmem:[%s2 + $0x328] sm:$0xff]
    %v124 = vld [vmem:[%s2 + $0x330] sm:$0xff]
    %v125 = vld [vmem:[%s2 + $0x338] sm:$0xff]
    %v126 = vld [vmem:[%s2 + $0x340] sm:$0xff]
    %v127 = vld [vmem:[%s2 + $0x348] sm:$0xff]
    %v128 = vld [vmem:[%s2 + $0x350] sm:$0xff]
    %v129 = vld [vmem:[%s2 + $0x358] sm:$0xff]
    %v130 = vld [vmem:[%s2 + $0x360] sm:$0xff]
    %v131 = vld [vmem:[%s2 + $0x368] sm:$0xff]
    %v132 = vld [vmem:[%s2 + $0x370] sm:$0xff]
    %v133 = vld [vmem:[%s2 + $0x378] sm:$0xff]
    %v134 = vld [vmem:[%s2 + $0x380] sm:$0xff]
    %v135 = vld [vmem:[%s2 + $0x388] sm:$0xff]
    %v136 = vld [vmem:[%s2 + $0x390] sm:$0xff]
    %v137 = vld [vmem:[%s2 + $0x398] sm:$0xff]
    %v138 = vld [vmem:[%s2 + $0x3a0] sm:$0xff]
    %v139 = vld [vmem:[%s2 + $0x3a8] sm:$0xff]
    %v140 = vld [vmem:[%s2 + $0x3b0] sm:$0xff]
    %v141 = vld [vmem:[%s2 + $0x3b8] sm:$0xff]
    %v142 = vld [vmem:[%s2 + $0x3c0] sm:$0xff]
    %v143 = vld [vmem:[%s2 + $0x3c8] sm:$0xff]
    %v144 = vld [vmem:[%s2 + $0x3d0] sm:$0xff]
    %v145 = vld [vmem:[%s2 + $0x3d8] sm:$0xff]
    %v146 = vld [vmem:[%s2 + $0x3e0] sm:$0xff]
    %v147 = vld [vmem:[%s2 + $0x3e8] sm:$0xff]
    %v148 = vld [vmem:[%s2 + $0x3f0] sm:$0xff]
    %v149 = vld [vmem:[%s2 + $0x3f8] sm:$0xff]
    %v150 = vld [vmem:[%s2 + $0x400] sm:$0xff]
    %v151 = vld [vmem:[%s2 + $0x408] sm:$0xff]
    %v152 = vld [vmem:[%s2 + $0x410] sm:$0xff]
    %v153 = vld [vmem:[%s2 + $0x418] sm:$0xff]
    %v154 = vld [vmem:[%s2 + $0x420] sm:$0xff]
    %v155 = vld [vmem:[%s2 + $0x428] sm:$0xff]
    %v156 = vld [vmem:[%s2 + $0x430] sm:$0xff]
    %v157 = vld [vmem:[%s2 + $0x438] sm:$0xff]
    %v158 = vld [vmem:[%s2 + $0x440] sm:$0xff]
    %v159 = vld [vmem:[%s2 + $0x448] sm:$0xff]
    %v160 = vld [vmem:[%s2 + $0x450] sm:$0xff]
    %v161 = vld [vmem:[%s2 + $0x458] sm:$0xff]
    %v162 = vld [vmem:[%s2 + $0x460] sm:$0xff]
    %v163 = vld [vmem:[%s2 + $0x468] sm:$0xff]
    %v164 = vld [vmem:[%s2 + $0x470] sm:$0xff]
    %v165 = vld [vmem:[%s2 + $0x478] sm:$0xff]
    %v166 = vld [vmem:[%s2 + $0x480] sm:$0xff]
    %v167 = vld [vmem:[%s2 + $0x488] sm:$0xff]
    %v168 = vld [vmem:[%s2 + $0x490] sm:$0xff]
    %v169 = vld [vmem:[%s2 + $0x498] sm:$0xff]
    %v170 = vld [vmem:[%s2 + $0x4a0] sm:$0xff]
    %v171 = vld [vmem:[%s2 + $0x4a8] sm:$0xff]
    %v172 = vld [vmem:[%s2 + $0x4b0] sm:$0xff]
    %v173 = vld [vmem:[%s2 + $0x4b8] sm:$0xff]
    %v174 = vld [vmem:[%s2 + $0x4c0] sm:$0xff]
    %v175 = vld [vmem:[%s2 + $0x4c8] sm:$0xff]
    %v176 = vld [vmem:[%s2 + $0x4d0] sm:$0xff]
    %v177 = vld [vmem:[%s2 + $0x4d8] sm:$0xff]
    %v178 = vld [vmem:[%s2 + $0x4e0] sm:$0xff]
    %v179 = vld [vmem:[%s2 + $0x4e8] sm:$0xff]
    %v180 = vld [vmem:[%s2 + $0x4f0] sm:$0xff]
    %v181 = vld [vmem:[%s2 + $0x4f8] sm:$0xff]
    %v183 = vlaneseq
    %v184 = vshrl.u32 %v183, 7
    %v185 = vsub.s32 0, %v184
    %v186 = vrot.slane %v21, %v185
    %v187 = vlaneseq
    %v188 = vshrl.u32 %v187, 7
    %v189 = vsub.s32 1, %v188
    %v190 = vrot.slane %v21, %v189
    %v191 = vlaneseq
    %v192 = vshrl.u32 %v191, 7
    %v193 = vsub.s32 2, %v192
    %v194 = vrot.slane %v21, %v193
    %v195 = vlaneseq
    %v196 = vshrl.u32 %v195, 7
    %v197 = vsub.s32 3, %v196
    %v198 = vrot.slane %v21, %v197
    %v199 = vlaneseq
    %v200 = vshrl.u32 %v199, 7
    %v201 = vsub.s32 4, %v200
    %v202 = vrot.slane %v21, %v201
    %v203 = vlaneseq
    %v204 = vshrl.u32 %v203, 7
    %v205 = vsub.s32 5, %v204
    %v206 = vrot.slane %v21, %v205
    %v207 = vlaneseq
    %v208 = vshrl.u32 %v207, 7
    %v209 = vsub.s32 6, %v208
    %v210 = vrot.slane %v21, %v209
    %v211 = vlaneseq
    %v212 = vshrl.u32 %v211, 7
    %v213 = vsub.s32 7, %v212
    %v214 = vrot.slane %v21, %v213
    %v223 = vmul.f32 %v22, %v186
    %v224 = vmul.f32 %v23, %v190
    %v225 = vmul.f32 %v24, %v194
    %v226 = vmul.f32 %v25, %v198
    %v227 = vmul.f32 %v26, %v202
    %v228 = vmul.f32 %v27, %v206
    %v229 = vmul.f32 %v28, %v210
    %v230 = vmul.f32 %v29, %v214
    %v231 = vmul.f32 %v30, %v186
    %v232 = vmul.f32 %v31, %v190
    %v233 = vmul.f32 %v32, %v194
    %v234 = vmul.f32 %v33, %v198
    %v235 = vmul.f32 %v34, %v202
    %v236 = vmul.f32 %v35, %v206
    %v237 = vmul.f32 %v36, %v210
    %v238 = vmul.f32 %v37, %v214
    %v239 = vmul.f32 %v38, %v186
    %v240 = vmul.f32 %v39, %v190
    %v241 = vmul.f32 %v40, %v194
    %v242 = vmul.f32 %v41, %v198
    %v243 = vmul.f32 %v42, %v202
    %v244 = vmul.f32 %v43, %v206
    %v245 = vmul.f32 %v44, %v210
    %v246 = vmul.f32 %v45, %v214
    %v247 = vmul.f32 %v46, %v186
    %v248 = vmul.f32 %v47, %v190
    %v249 = vmul.f32 %v48, %v194
    %v250 = vmul.f32 %v49, %v198
    %v251 = vmul.f32 %v50, %v202
    %v252 = vmul.f32 %v51, %v206
    %v253 = vmul.f32 %v52, %v210
    %v254 = vmul.f32 %v53, %v214
    %v255 = vmul.f32 %v54, %v186
    %v256 = vmul.f32 %v55, %v190
    %v257 = vmul.f32 %v56, %v194
    %v258 = vmul.f32 %v57, %v198
    %v259 = vmul.f32 %v58, %v202
    %v260 = vmul.f32 %v59, %v206
    %v261 = vmul.f32 %v60, %v210
    %v262 = vmul.f32 %v61, %v214
    %v263 = vmul.f32 %v62, %v186
    %v264 = vmul.f32 %v63, %v190
    %v265 = vmul.f32 %v64, %v194
    %v266 = vmul.f32 %v65, %v198
    %v267 = vmul.f32 %v66, %v202
    %v268 = vmul.f32 %v67, %v206
    %v269 = vmul.f32 %v68, %v210
    %v270 = vmul.f32 %v69, %v214
    %v271 = vmul.f32 %v70, %v186
    %v272 = vmul.f32 %v71, %v190
    %v273 = vmul.f32 %v72, %v194
    %v274 = vmul.f32 %v73, %v198
    %v275 = vmul.f32 %v74, %v202
    %v276 = vmul.f32 %v75, %v206
    %v277 = vmul.f32 %v76, %v210
    %v278 = vmul.f32 %v77, %v214
    %v279 = vmul.f32 %v78, %v186
    %v280 = vmul.f32 %v79, %v190
    %v281 = vmul.f32 %v80, %v194
    %v282 = vmul.f32 %v81, %v198
    %v283 = vmul.f32 %v82, %v202
    %v284 = vmul.f32 %v83, %v206
    %v285 = vmul.f32 %v84, %v210
    %v286 = vmul.f32 %v85, %v214
    %v287 = vmul.f32 %v86, %v186
    %v288 = vmul.f32 %v87, %v190
    %v289 = vmul.f32 %v88, %v194
    %v290 = vmul.f32 %v89, %v198
    %v291 = vmul.f32 %v90, %v202
    %v292 = vmul.f32 %v91, %v206
    %v293 = vmul.f32 %v92, %v210
    %v294 = vmul.f32 %v93, %v214
    %v295 = vmul.f32 %v94, %v186
    %v296 = vmul.f32 %v95, %v190
    %v297 = vmul.f32 %v96, %v194
    %v298 = vmul.f32 %v97, %v198
    %v299 = vmul.f32 %v98, %v202
    %v300 = vmul.f32 %v99, %v206
    %v301 = vmul.f32 %v100, %v210
    %v302 = vmul.f32 %v101, %v214
    %v303 = vmul.f32 %v102, %v186
    %v304 = vmul.f32 %v103, %v190
    %v305 = vmul.f32 %v104, %v194
    %v306 = vmul.f32 %v105, %v198
    %v307 = vmul.f32 %v106, %v202
    %v308 = vmul.f32 %v107, %v206
    %v309 = vmul.f32 %v108, %v210
    %v310 = vmul.f32 %v109, %v214
    %v311 = vmul.f32 %v110, %v186
    %v312 = vmul.f32 %v111, %v190
    %v313 = vmul.f32 %v112, %v194
    %v314 = vmul.f32 %v113, %v198
    %v315 = vmul.f32 %v114, %v202
    %v316 = vmul.f32 %v115, %v206
    %v317 = vmul.f32 %v116, %v210
    %v318 = vmul.f32 %v117, %v214
    %v319 = vmul.f32 %v118, %v186
    %v320 = vmul.f32 %v119, %v190
    %v321 = vmul.f32 %v120, %v194
    %v322 = vmul.f32 %v121, %v198
    %v323 = vmul.f32 %v122, %v202
    %v324 = vmul.f32 %v123, %v206
    %v325 = vmul.f32 %v124, %v210
    %v326 = vmul.f32 %v125, %v214
    %v327 = vmul.f32 %v126, %v186
    %v328 = vmul.f32 %v127, %v190
    %v329 = vmul.f32 %v128, %v194
    %v330 = vmul.f32 %v129, %v198
    %v331 = vmul.f32 %v130, %v202
    %v332 = vmul.f32 %v131, %v206
    %v333 = vmul.f32 %v132, %v210
    %v334 = vmul.f32 %v133, %v214
    %v335 = vmul.f32 %v134, %v186
    %v336 = vmul.f32 %v135, %v190
    %v337 = vmul.f32 %v136, %v194
    %v338 = vmul.f32 %v137, %v198
    %v339 = vmul.f32 %v138, %v202
    %v340 = vmul.f32 %v139, %v206
    %v341 = vmul.f32 %v140, %v210
    %v342 = vmul.f32 %v141, %v214
    %v343 = vmul.f32 %v142, %v186
    %v344 = vmul.f32 %v143, %v190
    %v345 = vmul.f32 %v144, %v194
    %v346 = vmul.f32 %v145, %v198
    %v347 = vmul.f32 %v146, %v202
    %v348 = vmul.f32 %v147, %v206
    %v349 = vmul.f32 %v148, %v210
    %v350 = vmul.f32 %v149, %v214
    %v351 = vmul.f32 %v150, %v186
    %v352 = vmul.f32 %v151, %v190
    %v353 = vmul.f32 %v152, %v194
    %v354 = vmul.f32 %v153, %v198
    %v355 = vmul.f32 %v154, %v202
    %v356 = vmul.f32 %v155, %v206
    %v357 = vmul.f32 %v156, %v210
    %v358 = vmul.f32 %v157, %v214
    %v359 = vmul.f32 %v158, %v186
    %v360 = vmul.f32 %v159, %v190
    %v361 = vmul.f32 %v160, %v194
    %v362 = vmul.f32 %v161, %v198
    %v363 = vmul.f32 %v162, %v202
    %v364 = vmul.f32 %v163, %v206
    %v365 = vmul.f32 %v164, %v210
    %v366 = vmul.f32 %v165, %v214
    %v367 = vmul.f32 %v166, %v186
    %v368 = vmul.f32 %v167, %v190
    %v369 = vmul.f32 %v168, %v194
    %v370 = vmul.f32 %v169, %v198
    %v371 = vmul.f32 %v170, %v202
    %v372 = vmul.f32 %v171, %v206
    %v373 = vmul.f32 %v172, %v210
    %v374 = vmul.f32 %v173, %v214
    %v375 = vmul.f32 %v174, %v186
    %v376 = vmul.f32 %v175, %v190
    %v377 = vmul.f32 %v176, %v194
    %v378 = vmul.f32 %v177, %v198
    %v379 = vmul.f32 %v178, %v202
    %v380 = vmul.f32 %v179, %v206
    %v381 = vmul.f32 %v180, %v210
    %v382 = vmul.f32 %v181, %v214
    %v383 = vld [vmem:[%s0] sm:$0xff]
    %v384 = vld [vmem:[%s0 + $0x8] sm:$0xff]
    %v385 = vld [vmem:[%s0 + $0x10] sm:$0xff]
    %v386 = vld [vmem:[%s0 + $0x18] sm:$0xff]
    %v387 = vld [vmem:[%s0 + $0x20] sm:$0xff]
    %v388 = vld [vmem:[%s0 + $0x28] sm:$0xff]
    %v389 = vld [vmem:[%s0 + $0x30] sm:$0xff]
    %v390 = vld [vmem:[%s0 + $0x38] sm:$0xff]
    %v391 = vld [vmem:[%s0 + $0x40] sm:$0xff]
    %v392 = vld [vmem:[%s0 + $0x48] sm:$0xff]
    %v393 = vld [vmem:[%s0 + $0x50] sm:$0xff]
    %v394 = vld [vmem:[%s0 + $0x58] sm:$0xff]
    %v395 = vld [vmem:[%s0 + $0x60] sm:$0xff]
    %v396 = vld [vmem:[%s0 + $0x68] sm:$0xff]
    %v397 = vld [vmem:[%s0 + $0x70] sm:$0xff]
    %v398 = vld [vmem:[%s0 + $0x78] sm:$0xff]
    %v399 = vld [vmem:[%s0 + $0x80] sm:$0xff]
    %v400 = vld [vmem:[%s0 + $0x88] sm:$0xff]
    %v401 = vld [vmem:[%s0 + $0x90] sm:$0xff]
    %v402 = vld [vmem:[%s0 + $0x98] sm:$0xff]
    %v403 = vld [vmem:[%s0 + $0xa0] sm:$0xff]
    %v404 = vld [vmem:[%s0 + $0xa8] sm:$0xff]
    %v405 = vld [vmem:[%s0 + $0xb0] sm:$0xff]
    %v406 = vld [vmem:[%s0 + $0xb8] sm:$0xff]
    %v407 = vld [vmem:[%s0 + $0xc0] sm:$0xff]
    %v408 = vld [vmem:[%s0 + $0xc8] sm:$0xff]
    %v409 = vld [vmem:[%s0 + $0xd0] sm:$0xff]
    %v410 = vld [vmem:[%s0 + $0xd8] sm:$0xff]
    %v411 = vld [vmem:[%s0 + $0xe0] sm:$0xff]
    %v412 = vld [vmem:[%s0 + $0xe8] sm:$0xff]
    %v413 = vld [vmem:[%s0 + $0xf0] sm:$0xff]
    %v414 = vld [vmem:[%s0 + $0xf8] sm:$0xff]
    %v415 = vld [vmem:[%s0 + $0x100] sm:$0xff]
    %v416 = vld [vmem:[%s0 + $0x108] sm:$0xff]
    %v417 = vld [vmem:[%s0 + $0x110] sm:$0xff]
    %v418 = vld [vmem:[%s0 + $0x118] sm:$0xff]
    %v419 = vld [vmem:[%s0 + $0x120] sm:$0xff]
    %v420 = vld [vmem:[%s0 + $0x128] sm:$0xff]
    %v421 = vld [vmem:[%s0 + $0x130] sm:$0xff]
    %v422 = vld [vmem:[%s0 + $0x138] sm:$0xff]
    %v423 = vld [vmem:[%s0 + $0x140] sm:$0xff]
    %v424 = vld [vmem:[%s0 + $0x148] sm:$0xff]
    %v425 = vld [vmem:[%s0 + $0x150] sm:$0xff]
    %v426 = vld [vmem:[%s0 + $0x158] sm:$0xff]
    %v427 = vld [vmem:[%s0 + $0x160] sm:$0xff]
    %v428 = vld [vmem:[%s0 + $0x168] sm:$0xff]
    %v429 = vld [vmem:[%s0 + $0x170] sm:$0xff]
    %v430 = vld [vmem:[%s0 + $0x178] sm:$0xff]
    %v431 = vld [vmem:[%s0 + $0x180] sm:$0xff]
    %v432 = vld [vmem:[%s0 + $0x188] sm:$0xff]
    %v433 = vld [vmem:[%s0 + $0x190] sm:$0xff]
    %v434 = vld [vmem:[%s0 + $0x198] sm:$0xff]
    %v435 = vld [vmem:[%s0 + $0x1a0] sm:$0xff]
    %v436 = vld [vmem:[%s0 + $0x1a8] sm:$0xff]
    %v437 = vld [vmem:[%s0 + $0x1b0] sm:$0xff]
    %v438 = vld [vmem:[%s0 + $0x1b8] sm:$0xff]
    %v439 = vld [vmem:[%s0 + $0x1c0] sm:$0xff]
    %v440 = vld [vmem:[%s0 + $0x1c8] sm:$0xff]
    %v441 = vld [vmem:[%s0 + $0x1d0] sm:$0xff]
    %v442 = vld [vmem:[%s0 + $0x1d8] sm:$0xff]
    %v443 = vld [vmem:[%s0 + $0x1e0] sm:$0xff]
    %v444 = vld [vmem:[%s0 + $0x1e8] sm:$0xff]
    %v445 = vld [vmem:[%s0 + $0x1f0] sm:$0xff]
    %v446 = vld [vmem:[%s0 + $0x1f8] sm:$0xff]
    %v447 = vld [vmem:[%s0 + $0x200] sm:$0xff]
    %v448 = vld [vmem:[%s0 + $0x208] sm:$0xff]
    %v449 = vld [vmem:[%s0 + $0x210] sm:$0xff]
    %v450 = vld [vmem:[%s0 + $0x218] sm:$0xff]
    %v451 = vld [vmem:[%s0 + $0x220] sm:$0xff]
    %v452 = vld [vmem:[%s0 + $0x228] sm:$0xff]
    %v453 = vld [vmem:[%s0 + $0x230] sm:$0xff]
    %v454 = vld [vmem:[%s0 + $0x238] sm:$0xff]
    %v455 = vld [vmem:[%s0 + $0x240] sm:$0xff]
    %v456 = vld [vmem:[%s0 + $0x248] sm:$0xff]
    %v457 = vld [vmem:[%s0 + $0x250] sm:$0xff]
    %v458 = vld [vmem:[%s0 + $0x258] sm:$0xff]
    %v459 = vld [vmem:[%s0 + $0x260] sm:$0xff]
    %v460 = vld [vmem:[%s0 + $0x268] sm:$0xff]
    %v461 = vld [vmem:[%s0 + $0x270] sm:$0xff]
    %v462 = vld [vmem:[%s0 + $0x278] sm:$0xff]
    %v463 = vld [vmem:[%s0 + $0x280] sm:$0xff]
    %v464 = vld [vmem:[%s0 + $0x288] sm:$0xff]
    %v465 = vld [vmem:[%s0 + $0x290] sm:$0xff]
    %v466 = vld [vmem:[%s0 + $0x298] sm:$0xff]
    %v467 = vld [vmem:[%s0 + $0x2a0] sm:$0xff]
    %v468 = vld [vmem:[%s0 + $0x2a8] sm:$0xff]
    %v469 = vld [vmem:[%s0 + $0x2b0] sm:$0xff]
    %v470 = vld [vmem:[%s0 + $0x2b8] sm:$0xff]
    %v471 = vld [vmem:[%s0 + $0x2c0] sm:$0xff]
    %v472 = vld [vmem:[%s0 + $0x2c8] sm:$0xff]
    %v473 = vld [vmem:[%s0 + $0x2d0] sm:$0xff]
    %v474 = vld [vmem:[%s0 + $0x2d8] sm:$0xff]
    %v475 = vld [vmem:[%s0 + $0x2e0] sm:$0xff]
    %v476 = vld [vmem:[%s0 + $0x2e8] sm:$0xff]
    %v477 = vld [vmem:[%s0 + $0x2f0] sm:$0xff]
    %v478 = vld [vmem:[%s0 + $0x2f8] sm:$0xff]
    %v479 = vld [vmem:[%s0 + $0x300] sm:$0xff]
    %v480 = vld [vmem:[%s0 + $0x308] sm:$0xff]
    %v481 = vld [vmem:[%s0 + $0x310] sm:$0xff]
    %v482 = vld [vmem:[%s0 + $0x318] sm:$0xff]
    %v483 = vld [vmem:[%s0 + $0x320] sm:$0xff]
    %v484 = vld [vmem:[%s0 + $0x328] sm:$0xff]
    %v485 = vld [vmem:[%s0 + $0x330] sm:$0xff]
    %v486 = vld [vmem:[%s0 + $0x338] sm:$0xff]
    %v487 = vld [vmem:[%s0 + $0x340] sm:$0xff]
    %v488 = vld [vmem:[%s0 + $0x348] sm:$0xff]
    %v489 = vld [vmem:[%s0 + $0x350] sm:$0xff]
    %v490 = vld [vmem:[%s0 + $0x358] sm:$0xff]
    %v491 = vld [vmem:[%s0 + $0x360] sm:$0xff]
    %v492 = vld [vmem:[%s0 + $0x368] sm:$0xff]
    %v493 = vld [vmem:[%s0 + $0x370] sm:$0xff]
    %v494 = vld [vmem:[%s0 + $0x378] sm:$0xff]
    %v495 = vld [vmem:[%s0 + $0x380] sm:$0xff]
    %v496 = vld [vmem:[%s0 + $0x388] sm:$0xff]
    %v497 = vld [vmem:[%s0 + $0x390] sm:$0xff]
    %v498 = vld [vmem:[%s0 + $0x398] sm:$0xff]
    %v499 = vld [vmem:[%s0 + $0x3a0] sm:$0xff]
    %v500 = vld [vmem:[%s0 + $0x3a8] sm:$0xff]
    %v501 = vld [vmem:[%s0 + $0x3b0] sm:$0xff]
    %v502 = vld [vmem:[%s0 + $0x3b8] sm:$0xff]
    %v503 = vld [vmem:[%s0 + $0x3c0] sm:$0xff]
    %v504 = vld [vmem:[%s0 + $0x3c8] sm:$0xff]
    %v505 = vld [vmem:[%s0 + $0x3d0] sm:$0xff]
    %v506 = vld [vmem:[%s0 + $0x3d8] sm:$0xff]
    %v507 = vld [vmem:[%s0 + $0x3e0] sm:$0xff]
    %v508 = vld [vmem:[%s0 + $0x3e8] sm:$0xff]
    %v509 = vld [vmem:[%s0 + $0x3f0] sm:$0xff]
    %v510 = vld [vmem:[%s0 + $0x3f8] sm:$0xff]
    %v511 = vld [vmem:[%s0 + $0x400] sm:$0xff]
    %v512 = vld [vmem:[%s0 + $0x408] sm:$0xff]
    %v513 = vld [vmem:[%s0 + $0x410] sm:$0xff]
    %v514 = vld [vmem:[%s0 + $0x418] sm:$0xff]
    %v515 = vld [vmem:[%s0 + $0x420] sm:$0xff]
    %v516 = vld [vmem:[%s0 + $0x428] sm:$0xff]
    %v517 = vld [vmem:[%s0 + $0x430] sm:$0xff]
    %v518 = vld [vmem:[%s0 + $0x438] sm:$0xff]
    %v519 = vld [vmem:[%s0 + $0x440] sm:$0xff]
    %v520 = vld [vmem:[%s0 + $0x448] sm:$0xff]
    %v521 = vld [vmem:[%s0 + $0x450] sm:$0xff]
    %v522 = vld [vmem:[%s0 + $0x458] sm:$0xff]
    %v523 = vld [vmem:[%s0 + $0x460] sm:$0xff]
    %v524 = vld [vmem:[%s0 + $0x468] sm:$0xff]
    %v525 = vld [vmem:[%s0 + $0x470] sm:$0xff]
    %v526 = vld [vmem:[%s0 + $0x478] sm:$0xff]
    %v527 = vld [vmem:[%s0 + $0x480] sm:$0xff]
    %v528 = vld [vmem:[%s0 + $0x488] sm:$0xff]
    %v529 = vld [vmem:[%s0 + $0x490] sm:$0xff]
    %v530 = vld [vmem:[%s0 + $0x498] sm:$0xff]
    %v531 = vld [vmem:[%s0 + $0x4a0] sm:$0xff]
    %v532 = vld [vmem:[%s0 + $0x4a8] sm:$0xff]
    %v533 = vld [vmem:[%s0 + $0x4b0] sm:$0xff]
    %v534 = vld [vmem:[%s0 + $0x4b8] sm:$0xff]
    %v535 = vld [vmem:[%s0 + $0x4c0] sm:$0xff]
    %v536 = vld [vmem:[%s0 + $0x4c8] sm:$0xff]
    %v537 = vld [vmem:[%s0 + $0x4d0] sm:$0xff]
    %v538 = vld [vmem:[%s0 + $0x4d8] sm:$0xff]
    %v539 = vld [vmem:[%s0 + $0x4e0] sm:$0xff]
    %v540 = vld [vmem:[%s0 + $0x4e8] sm:$0xff]
    %v541 = vld [vmem:[%s0 + $0x4f0] sm:$0xff]
    %v542 = vld [vmem:[%s0 + $0x4f8] sm:$0xff]
    %v543 = vld [vmem:[%s0 + $0x500] sm:$0xff]
    %v544 = vld [vmem:[%s0 + $0x508] sm:$0xff]
    %v545 = vld [vmem:[%s0 + $0x510] sm:$0xff]
    %v546 = vld [vmem:[%s0 + $0x518] sm:$0xff]
    %v547 = vld [vmem:[%s0 + $0x520] sm:$0xff]
    %v548 = vld [vmem:[%s0 + $0x528] sm:$0xff]
    %v549 = vld [vmem:[%s0 + $0x530] sm:$0xff]
    %v550 = vld [vmem:[%s0 + $0x538] sm:$0xff]
    %v551 = vld [vmem:[%s0 + $0x540] sm:$0xff]
    %v552 = vld [vmem:[%s0 + $0x548] sm:$0xff]
    %v553 = vld [vmem:[%s0 + $0x550] sm:$0xff]
    %v554 = vld [vmem:[%s0 + $0x558] sm:$0xff]
    %v555 = vld [vmem:[%s0 + $0x560] sm:$0xff]
    %v556 = vld [vmem:[%s0 + $0x568] sm:$0xff]
    %v557 = vld [vmem:[%s0 + $0x570] sm:$0xff]
    %v558 = vld [vmem:[%s0 + $0x578] sm:$0xff]
    %v559 = vld [vmem:[%s0 + $0x580] sm:$0xff]
    %v560 = vld [vmem:[%s0 + $0x588] sm:$0xff]
    %v561 = vld [vmem:[%s0 + $0x590] sm:$0xff]
    %v562 = vld [vmem:[%s0 + $0x598] sm:$0xff]
    %v563 = vld [vmem:[%s0 + $0x5a0] sm:$0xff]
    %v564 = vld [vmem:[%s0 + $0x5a8] sm:$0xff]
    %v565 = vld [vmem:[%s0 + $0x5b0] sm:$0xff]
    %v566 = vld [vmem:[%s0 + $0x5b8] sm:$0xff]
    %v567 = vld [vmem:[%s0 + $0x5c0] sm:$0xff]
    %v568 = vld [vmem:[%s0 + $0x5c8] sm:$0xff]
    %v569 = vld [vmem:[%s0 + $0x5d0] sm:$0xff]
    %v570 = vld [vmem:[%s0 + $0x5d8] sm:$0xff]
    %v571 = vld [vmem:[%s0 + $0x5e0] sm:$0xff]
    %v572 = vld [vmem:[%s0 + $0x5e8] sm:$0xff]
    %v573 = vld [vmem:[%s0 + $0x5f0] sm:$0xff]
    %v574 = vld [vmem:[%s0 + $0x5f8] sm:$0xff]
    %v575 = vld [vmem:[%s0 + $0x600] sm:$0xff]
    %v576 = vld [vmem:[%s0 + $0x608] sm:$0xff]
    %v577 = vld [vmem:[%s0 + $0x610] sm:$0xff]
    %v578 = vld [vmem:[%s0 + $0x618] sm:$0xff]
    %v579 = vld [vmem:[%s0 + $0x620] sm:$0xff]
    %v580 = vld [vmem:[%s0 + $0x628] sm:$0xff]
    %v581 = vld [vmem:[%s0 + $0x630] sm:$0xff]
    %v582 = vld [vmem:[%s0 + $0x638] sm:$0xff]
    %v583 = vld [vmem:[%s0 + $0x640] sm:$0xff]
    %v584 = vld [vmem:[%s0 + $0x648] sm:$0xff]
    %v585 = vld [vmem:[%s0 + $0x650] sm:$0xff]
    %v586 = vld [vmem:[%s0 + $0x658] sm:$0xff]
    %v587 = vld [vmem:[%s0 + $0x660] sm:$0xff]
    %v588 = vld [vmem:[%s0 + $0x668] sm:$0xff]
    %v589 = vld [vmem:[%s0 + $0x670] sm:$0xff]
    %v590 = vld [vmem:[%s0 + $0x678] sm:$0xff]
    %v591 = vld [vmem:[%s0 + $0x680] sm:$0xff]
    %v592 = vld [vmem:[%s0 + $0x688] sm:$0xff]
    %v593 = vld [vmem:[%s0 + $0x690] sm:$0xff]
    %v594 = vld [vmem:[%s0 + $0x698] sm:$0xff]
    %v595 = vld [vmem:[%s0 + $0x6a0] sm:$0xff]
    %v596 = vld [vmem:[%s0 + $0x6a8] sm:$0xff]
    %v597 = vld [vmem:[%s0 + $0x6b0] sm:$0xff]
    %v598 = vld [vmem:[%s0 + $0x6b8] sm:$0xff]
    %v599 = vld [vmem:[%s0 + $0x6c0] sm:$0xff]
    %v600 = vld [vmem:[%s0 + $0x6c8] sm:$0xff]
    %v601 = vld [vmem:[%s0 + $0x6d0] sm:$0xff]
    %v602 = vld [vmem:[%s0 + $0x6d8] sm:$0xff]
    %v603 = vld [vmem:[%s0 + $0x6e0] sm:$0xff]
    %v604 = vld [vmem:[%s0 + $0x6e8] sm:$0xff]
    %v605 = vld [vmem:[%s0 + $0x6f0] sm:$0xff]
    %v606 = vld [vmem:[%s0 + $0x6f8] sm:$0xff]
    %v607 = vld [vmem:[%s0 + $0x700] sm:$0xff]
    %v608 = vld [vmem:[%s0 + $0x708] sm:$0xff]
    %v609 = vld [vmem:[%s0 + $0x710] sm:$0xff]
    %v610 = vld [vmem:[%s0 + $0x718] sm:$0xff]
    %v611 = vld [vmem:[%s0 + $0x720] sm:$0xff]
    %v612 = vld [vmem:[%s0 + $0x728] sm:$0xff]
    %v613 = vld [vmem:[%s0 + $0x730] sm:$0xff]
    %v614 = vld [vmem:[%s0 + $0x738] sm:$0xff]
    %v615 = vld [vmem:[%s0 + $0x740] sm:$0xff]
    %v616 = vld [vmem:[%s0 + $0x748] sm:$0xff]
    %v617 = vld [vmem:[%s0 + $0x750] sm:$0xff]
    %v618 = vld [vmem:[%s0 + $0x758] sm:$0xff]
    %v619 = vld [vmem:[%s0 + $0x760] sm:$0xff]
    %v620 = vld [vmem:[%s0 + $0x768] sm:$0xff]
    %v621 = vld [vmem:[%s0 + $0x770] sm:$0xff]
    %v622 = vld [vmem:[%s0 + $0x778] sm:$0xff]
    %vm623 = vcmask 523264
    %v625 = vsel %vm623, %v230, 0
    %v628 = vsel %vm623, %v238, 0
    %v631 = vsel %vm623, %v246, 0
    %v634 = vsel %vm623, %v254, 0
    %v637 = vsel %vm623, %v262, 0
    %v640 = vsel %vm623, %v270, 0
    %v643 = vsel %vm623, %v278, 0
    %v646 = vsel %vm623, %v286, 0
    %v649 = vsel %vm623, %v294, 0
    %v652 = vsel %vm623, %v302, 0
    %v655 = vsel %vm623, %v310, 0
    %v658 = vsel %vm623, %v318, 0
    %v661 = vsel %vm623, %v326, 0
    %v664 = vsel %vm623, %v334, 0
    %v667 = vsel %vm623, %v342, 0
    %v670 = vsel %vm623, %v350, 0
    %v673 = vsel %vm623, %v358, 0
    %v676 = vsel %vm623, %v366, 0
    %v679 = vsel %vm623, %v374, 0
    %v682 = vsel %vm623, %v382, 0
    %684 = vmatprep.subr.mxu0 %v384
    %685 = vmatpush1.msra.mxu0 %v383
    %686 = vmatprep.subr.mxu0 %v386
    %687 = vmatpush1.msra.mxu0 %v385
    %688 = vmatprep.subr.mxu0 %v388
    %689 = vmatpush1.msra.mxu0 %v387
    %690 = vmatprep.subr.mxu0 %v390
    %691 = vmatpush1.msra.mxu0 %v389
    %692 = vmatprep.subr.mxu0 %v392
    %693 = vmatpush1.msra.mxu0 %v391
    %694 = vmatprep.subr.mxu0 %v394
    %695 = vmatpush1.msra.mxu0 %v393
    %696 = vmatprep.subr.mxu0 %v396
    %697 = vmatpush1.msra.mxu0 %v395
    %698 = vmatprep.subr.mxu0 %v398
    %699 = vmatpush1.msra.mxu0 %v397
    %700 = vmatprep.subr.mxu0 %v400
    %701 = vmatpush1.msra.mxu0 %v399
    %702 = vmatprep.subr.mxu0 %v402
    %703 = vmatpush1.msra.mxu0 %v401
    %704 = vmatprep.subr.mxu0 %v404
    %705 = vmatpush1.msra.mxu0 %v403
    %706 = vmatprep.subr.mxu0 %v406
    %707 = vmatpush1.msra.mxu0 %v405
    %708 = vmatprep.subr.mxu0 %v408
    %709 = vmatpush1.msra.mxu0 %v407
    %710 = vmatprep.subr.mxu0 %v410
    %711 = vmatpush1.msra.mxu0 %v409
    %712 = vmatprep.subr.mxu0 %v412
    %713 = vmatpush1.msra.mxu0 %v411
    %714 = vmatprep.subr.mxu0 %v414
    %715 = vmatpush1.msra.mxu0 %v413
    %716 = vmatprep.subr.mxu0 %v416
    %717 = vmatpush1.msra.mxu0 %v415
    %718 = vmatprep.subr.mxu0 %v418
    %719 = vmatpush1.msra.mxu0 %v417
    %720 = vmatprep.subr.mxu0 %v420
    %721 = vmatpush1.msra.mxu0 %v419
    %722 = vmatprep.subr.mxu0 %v422
    %723 = vmatpush1.msra.mxu0 %v421
    %724 = vmatprep.subr.mxu0 %v424
    %725 = vmatpush1.msra.mxu0 %v423
    %726 = vmatprep.subr.mxu0 %v426
    %727 = vmatpush1.msra.mxu0 %v425
    %728 = vmatprep.subr.mxu0 %v428
    %729 = vmatpush1.msra.mxu0 %v427
    %730 = vmatprep.subr.mxu0 %v430
    %731 = vmatpush1.msra.mxu0 %v429
    %732 = vmatprep.subr.mxu0 %v432
    %733 = vmatpush1.msra.mxu0 %v431
    %734 = vmatprep.subr.mxu0 %v434
    %735 = vmatpush1.msra.mxu0 %v433
    %736 = vmatprep.subr.mxu0 %v436
    %737 = vmatpush1.msra.mxu0 %v435
    %738 = vmatprep.subr.mxu0 %v438
    %739 = vmatpush1.msra.mxu0 %v437
    %740 = vmatprep.subr.mxu0 %v440
    %741 = vmatpush1.msra.mxu0 %v439
    %742 = vmatprep.subr.mxu0 %v442
    %743 = vmatpush1.msra.mxu0 %v441
    %744 = vmatprep.subr.mxu0 %v444
    %745 = vmatpush1.msra.mxu0 %v443
    %746 = vmatprep.subr.mxu0 %v446
    %747 = vmatpush1.msra.mxu0 %v445
    %748 = vmatprep.mubr.f32.mxu0 %v224
    %749 = vmatmul.mubr.f32.gmra.mrb[0].mxu0 %v223
    %v750 = vpop.f32.mrb[0].mxu0
    %v751 = vadd.f32 0.0, %v750
    %v752 = vpop.f32.mrb[0].mxu0
    %v753 = vadd.f32 0.0, %v752
    %754 = vmatprep.mubr.f32.mxu0 %v232
    %755 = vmatmul.mubr.f32.gmra.mrb[0].mxu0 %v231
    %v756 = vpop.f32.mrb[0].mxu0
    %v757 = vadd.f32 0.0, %v756
    %v758 = vpop.f32.mrb[0].mxu0
    %v759 = vadd.f32 0.0, %v758
    %760 = vmatprep.mubr.f32.mxu0 %v240
    %761 = vmatmul.mubr.f32.gmra.mrb[0].mxu0 %v239
    %v762 = vpop.f32.mrb[0].mxu0
    %v763 = vadd.f32 0.0, %v762
    %v764 = vpop.f32.mrb[0].mxu0
    %v765 = vadd.f32 0.0, %v764
    %766 = vmatprep.mubr.f32.mxu0 %v248
    %767 = vmatmul.mubr.f32.gmra.mrb[0].mxu0 %v247
    %v768 = vpop.f32.mrb[0].mxu0
    %v769 = vadd.f32 0.0, %v768
    %v770 = vpop.f32.mrb[0].mxu0
    %v771 = vadd.f32 0.0, %v770
    %772 = vmatprep.mubr.f32.mxu0 %v256
    %773 = vmatmul.mubr.f32.gmra.mrb[0].mxu0 %v255
    %v774 = vpop.f32.mrb[0].mxu0
    %v775 = vadd.f32 0.0, %v774
    %v776 = vpop.f32.mrb[0].mxu0
    %v777 = vadd.f32 0.0, %v776
    %778 = vmatprep.mubr.f32.mxu0 %v264
    %779 = vmatmul.mubr.f32.gmra.mrb[0].mxu0 %v263
    %v780 = vpop.f32.mrb[0].mxu0
    %v781 = vadd.f32 0.0, %v780
    %v782 = vpop.f32.mrb[0].mxu0
    %v783 = vadd.f32 0.0, %v782
    %784 = vmatprep.mubr.f32.mxu0 %v272
    %785 = vmatmul.mubr.f32.gmra.mrb[0].mxu0 %v271
    %v786 = vpop.f32.mrb[0].mxu0
    %v787 = vadd.f32 0.0, %v786
    %v788 = vpop.f32.mrb[0].mxu0
    %v789 = vadd.f32 0.0, %v788
    %790 = vmatprep.mubr.f32.mxu0 %v280
    %791 = vmatmul.mubr.f32.gmra.mrb[0].mxu0 %v279
    %v792 = vpop.f32.mrb[0].mxu0
    %v793 = vadd.f32 0.0, %v792
    %v794 = vpop.f32.mrb[0].mxu0
    %v795 = vadd.f32 0.0, %v794
    %796 = vmatprep.mubr.f32.mxu0 %v288
    %797 = vmatmul.mubr.f32.gmra.mrb[0].mxu0 %v287
    %v798 = vpop.f32.mrb[0].mxu0
    %v799 = vadd.f32 0.0, %v798
    %v800 = vpop.f32.mrb[0].mxu0
    %v801 = vadd.f32 0.0, %v800
    %802 = vmatprep.mubr.f32.mxu0 %v296
    %803 = vmatmul.mubr.f32.gmra.mrb[0].mxu0 %v295
    %v804 = vpop.f32.mrb[0].mxu0
    %v805 = vadd.f32 0.0, %v804
    %v806 = vpop.f32.mrb[0].mxu0
    %v807 = vadd.f32 0.0, %v806
    %808 = vmatprep.mubr.f32.mxu0 %v304
    %809 = vmatmul.mubr.f32.gmra.mrb[0].mxu0 %v303
    %v810 = vpop.f32.mrb[0].mxu0
    %v811 = vadd.f32 0.0, %v810
    %v812 = vpop.f32.mrb[0].mxu0
    %v813 = vadd.f32 0.0, %v812
    %814 = vmatprep.mubr.f32.mxu0 %v312
    %815 = vmatmul.mubr.f32.gmra.mrb[0].mxu0 %v311
    %v816 = vpop.f32.mrb[0].mxu0
    %v817 = vadd.f32 0.0, %v816
    %v818 = vpop.f32.mrb[0].mxu0
    %v819 = vadd.f32 0.0, %v818
    %820 = vmatprep.mubr.f32.mxu0 %v320
    %821 = vmatmul.mubr.f32.gmra.mrb[0].mxu0 %v319
    %v822 = vpop.f32.mrb[0].mxu0
    %v823 = vadd.f32 0.0, %v822
    %v824 = vpop.f32.mrb[0].mxu0
    %v825 = vadd.f32 0.0, %v824
    %826 = vmatprep.mubr.f32.mxu0 %v328
    %827 = vmatmul.mubr.f32.gmra.mrb[0].mxu0 %v327
    %v828 = vpop.f32.mrb[0].mxu0
    %v829 = vadd.f32 0.0, %v828
    %v830 = vpop.f32.mrb[0].mxu0
    %v831 = vadd.f32 0.0, %v830
    %832 = vmatprep.mubr.f32.mxu0 %v336
    %833 = vmatmul.mubr.f32.gmra.mrb[0].mxu0 %v335
    %v834 = vpop.f32.mrb[0].mxu0
    %v835 = vadd.f32 0.0, %v834
    %v836 = vpop.f32.mrb[0].mxu0
    %v837 = vadd.f32 0.0, %v836
    %838 = vmatprep.mubr.f32.mxu0 %v344
    %839 = vmatmul.mubr.f32.gmra.mrb[0].mxu0 %v343
    %v840 = vpop.f32.mrb[0].mxu0
    %v841 = vadd.f32 0.0, %v840
    %v842 = vpop.f32.mrb[0].mxu0
    %v843 = vadd.f32 0.0, %v842
    %844 = vmatprep.mubr.f32.mxu0 %v352
    %845 = vmatmul.mubr.f32.gmra.mrb[0].mxu0 %v351
    %v846 = vpop.f32.mrb[0].mxu0
    %v847 = vadd.f32 0.0, %v846
    %v848 = vpop.f32.mrb[0].mxu0
    %v849 = vadd.f32 0.0, %v848
    %850 = vmatprep.mubr.f32.mxu0 %v360
    %851 = vmatmul.mubr.f32.gmra.mrb[0].mxu0 %v359
    %v852 = vpop.f32.mrb[0].mxu0
    %v853 = vadd.f32 0.0, %v852
    %v854 = vpop.f32.mrb[0].mxu0
    %v855 = vadd.f32 0.0, %v854
    %856 = vmatprep.mubr.f32.mxu0 %v368
    %857 = vmatmul.mubr.f32.gmra.mrb[0].mxu0 %v367
    %v858 = vpop.f32.mrb[0].mxu0
    %v859 = vadd.f32 0.0, %v858
    %v860 = vpop.f32.mrb[0].mxu0
    %v861 = vadd.f32 0.0, %v860
    %862 = vmatprep.mubr.f32.mxu0 %v376
    %863 = vmatmul.mubr.f32.gmra.mrb[0].mxu0 %v375
    %v864 = vpop.f32.mrb[0].mxu0
    %v865 = vadd.f32 0.0, %v864
    %v866 = vpop.f32.mrb[0].mxu0
    %v867 = vadd.f32 0.0, %v866
    %868 = vdwg.mxu0
    %869 = vmatprep.subr.mxu0 %v448
    %870 = vmatpush1.msra.mxu0 %v447
    %871 = vmatprep.subr.mxu0 %v450
    %872 = vmatpush1.msra.mxu0 %v449
    %873 = vmatprep.subr.mxu0 %v452
    %874 = vmatpush1.msra.mxu0 %v451
    %875 = vmatprep.subr.mxu0 %v454
    %876 = vmatpush1.msra.mxu0 %v453
    %877 = vmatprep.subr.mxu0 %v456
    %878 = vmatpush1.msra.mxu0 %v455
    %879 = vmatprep.subr.mxu0 %v458
    %880 = vmatpush1.msra.mxu0 %v457
    %881 = vmatprep.subr.mxu0 %v460
    %882 = vmatpush1.msra.mxu0 %v459
    %883 = vmatprep.subr.mxu0 %v462
    %884 = vmatpush1.msra.mxu0 %v461
    %885 = vmatprep.subr.mxu0 %v464
    %886 = vmatpush1.msra.mxu0 %v463
    %887 = vmatprep.subr.mxu0 %v466
    %888 = vmatpush1.msra.mxu0 %v465
    %889 = vmatprep.subr.mxu0 %v468
    %890 = vmatpush1.msra.mxu0 %v467
    %891 = vmatprep.subr.mxu0 %v470
    %892 = vmatpush1.msra.mxu0 %v469
    %893 = vmatprep.subr.mxu0 %v472
    %894 = vmatpush1.msra.mxu0 %v471
    %895 = vmatprep.subr.mxu0 %v474
    %896 = vmatpush1.msra.mxu0 %v473
    %897 = vmatprep.subr.mxu0 %v476
    %898 = vmatpush1.msra.mxu0 %v475
    %899 = vmatprep.subr.mxu0 %v478
    %900 = vmatpush1.msra.mxu0 %v477
    %901 = vmatprep.subr.mxu0 %v480
    %902 = vmatpush1.msra.mxu0 %v479
    %903 = vmatprep.subr.mxu0 %v482
    %904 = vmatpush1.msra.mxu0 %v481
    %905 = vmatprep.subr.mxu0 %v484
    %906 = vmatpush1.msra.mxu0 %v483
    %907 = vmatprep.subr.mxu0 %v486
    %908 = vmatpush1.msra.mxu0 %v485
    %909 = vmatprep.subr.mxu0 %v488
    %910 = vmatpush1.msra.mxu0 %v487
    %911 = vmatprep.subr.mxu0 %v490
    %912 = vmatpush1.msra.mxu0 %v489
    %913 = vmatprep.subr.mxu0 %v492
    %914 = vmatpush1.msra.mxu0 %v491
    %915 = vmatprep.subr.mxu0 %v494
    %916 = vmatpush1.msra.mxu0 %v493
    %917 = vmatprep.subr.mxu0 %v496
    %918 = vmatpush1.msra.mxu0 %v495
    %919 = vmatprep.subr.mxu0 %v498
    %920 = vmatpush1.msra.mxu0 %v497
    %921 = vmatprep.subr.mxu0 %v500
    %922 = vmatpush1.msra.mxu0 %v499
    %923 = vmatprep.subr.mxu0 %v502
    %924 = vmatpush1.msra.mxu0 %v501
    %925 = vmatprep.subr.mxu0 %v504
    %926 = vmatpush1.msra.mxu0 %v503
    %927 = vmatprep.subr.mxu0 %v506
    %928 = vmatpush1.msra.mxu0 %v505
    %929 = vmatprep.subr.mxu0 %v508
    %930 = vmatpush1.msra.mxu0 %v507
    %931 = vmatprep.subr.mxu0 %v510
    %932 = vmatpush1.msra.mxu0 %v509
    %933 = vmatprep.mubr.f32.mxu0 %v226
    %934 = vmatmul.mubr.f32.gmra.mrb[0].mxu0 %v225
    %v935 = vpop.f32.mrb[0].mxu0
    %v936 = vadd.f32 %v751, %v935
    %v937 = vpop.f32.mrb[0].mxu0
    %v938 = vadd.f32 %v753, %v937
    %939 = vmatprep.mubr.f32.mxu0 %v234
    %940 = vmatmul.mubr.f32.gmra.mrb[0].mxu0 %v233
    %v941 = vpop.f32.mrb[0].mxu0
    %v942 = vadd.f32 %v757, %v941
    %v943 = vpop.f32.mrb[0].mxu0
    %v944 = vadd.f32 %v759, %v943
    %945 = vmatprep.mubr.f32.mxu0 %v242
    %946 = vmatmul.mubr.f32.gmra.mrb[0].mxu0 %v241
    %v947 = vpop.f32.mrb[0].mxu0
    %v948 = vadd.f32 %v763, %v947
    %v949 = vpop.f32.mrb[0].mxu0
    %v950 = vadd.f32 %v765, %v949
    %951 = vmatprep.mubr.f32.mxu0 %v250
    %952 = vmatmul.mubr.f32.gmra.mrb[0].mxu0 %v249
    %v953 = vpop.f32.mrb[0].mxu0
    %v954 = vadd.f32 %v769, %v953
    %v955 = vpop.f32.mrb[0].mxu0
    %v956 = vadd.f32 %v771, %v955
    %957 = vmatprep.mubr.f32.mxu0 %v258
    %958 = vmatmul.mubr.f32.gmra.mrb[0].mxu0 %v257
    %v959 = vpop.f32.mrb[0].mxu0
    %v960 = vadd.f32 %v775, %v959
    %v961 = vpop.f32.mrb[0].mxu0
    %v962 = vadd.f32 %v777, %v961
    %963 = vmatprep.mubr.f32.mxu0 %v266
    %964 = vmatmul.mubr.f32.gmra.mrb[0].mxu0 %v265
    %v965 = vpop.f32.mrb[0].mxu0
    %v966 = vadd.f32 %v781, %v965
    %v967 = vpop.f32.mrb[0].mxu0
    %v968 = vadd.f32 %v783, %v967
    %969 = vmatprep.mubr.f32.mxu0 %v274
    %970 = vmatmul.mubr.f32.gmra.mrb[0].mxu0 %v273
    %v971 = vpop.f32.mrb[0].mxu0
    %v972 = vadd.f32 %v787, %v971
    %v973 = vpop.f32.mrb[0].mxu0
    %v974 = vadd.f32 %v789, %v973
    %975 = vmatprep.mubr.f32.mxu0 %v282
    %976 = vmatmul.mubr.f32.gmra.mrb[0].mxu0 %v281
    %v977 = vpop.f32.mrb[0].mxu0
    %v978 = vadd.f32 %v793, %v977
    %v979 = vpop.f32.mrb[0].mxu0
    %v980 = vadd.f32 %v795, %v979
    %981 = vmatprep.mubr.f32.mxu0 %v290
    %982 = vmatmul.mubr.f32.gmra.mrb[0].mxu0 %v289
    %v983 = vpop.f32.mrb[0].mxu0
    %v984 = vadd.f32 %v799, %v983
    %v985 = vpop.f32.mrb[0].mxu0
    %v986 = vadd.f32 %v801, %v985
    %987 = vmatprep.mubr.f32.mxu0 %v298
    %988 = vmatmul.mubr.f32.gmra.mrb[0].mxu0 %v297
    %v989 = vpop.f32.mrb[0].mxu0
    %v990 = vadd.f32 %v805, %v989
    %v991 = vpop.f32.mrb[0].mxu0
    %v992 = vadd.f32 %v807, %v991
    %993 = vmatprep.mubr.f32.mxu0 %v306
    %994 = vmatmul.mubr.f32.gmra.mrb[0].mxu0 %v305
    %v995 = vpop.f32.mrb[0].mxu0
    %v996 = vadd.f32 %v811, %v995
    %v997 = vpop.f32.mrb[0].mxu0
    %v998 = vadd.f32 %v813, %v997
    %999 = vmatprep.mubr.f32.mxu0 %v314
    %1000 = vmatmul.mubr.f32.gmra.mrb[0].mxu0 %v313
    %v1001 = vpop.f32.mrb[0].mxu0
    %v1002 = vadd.f32 %v817, %v1001
    %v1003 = vpop.f32.mrb[0].mxu0
    %v1004 = vadd.f32 %v819, %v1003
    %1005 = vmatprep.mubr.f32.mxu0 %v322
    %1006 = vmatmul.mubr.f32.gmra.mrb[0].mxu0 %v321
    %v1007 = vpop.f32.mrb[0].mxu0
    %v1008 = vadd.f32 %v823, %v1007
    %v1009 = vpop.f32.mrb[0].mxu0
    %v1010 = vadd.f32 %v825, %v1009
    %1011 = vmatprep.mubr.f32.mxu0 %v330
    %1012 = vmatmul.mubr.f32.gmra.mrb[0].mxu0 %v329
    %v1013 = vpop.f32.mrb[0].mxu0
    %v1014 = vadd.f32 %v829, %v1013
    %v1015 = vpop.f32.mrb[0].mxu0
    %v1016 = vadd.f32 %v831, %v1015
    %1017 = vmatprep.mubr.f32.mxu0 %v338
    %1018 = vmatmul.mubr.f32.gmra.mrb[0].mxu0 %v337
    %v1019 = vpop.f32.mrb[0].mxu0
    %v1020 = vadd.f32 %v835, %v1019
    %v1021 = vpop.f32.mrb[0].mxu0
    %v1022 = vadd.f32 %v837, %v1021
    %1023 = vmatprep.mubr.f32.mxu0 %v346
    %1024 = vmatmul.mubr.f32.gmra.mrb[0].mxu0 %v345
    %v1025 = vpop.f32.mrb[0].mxu0
    %v1026 = vadd.f32 %v841, %v1025
    %v1027 = vpop.f32.mrb[0].mxu0
    %v1028 = vadd.f32 %v843, %v1027
    %1029 = vmatprep.mubr.f32.mxu0 %v354
    %1030 = vmatmul.mubr.f32.gmra.mrb[0].mxu0 %v353
    %v1031 = vpop.f32.mrb[0].mxu0
    %v1032 = vadd.f32 %v847, %v1031
    %v1033 = vpop.f32.mrb[0].mxu0
    %v1034 = vadd.f32 %v849, %v1033
    %1035 = vmatprep.mubr.f32.mxu0 %v362
    %1036 = vmatmul.mubr.f32.gmra.mrb[0].mxu0 %v361
    %v1037 = vpop.f32.mrb[0].mxu0
    %v1038 = vadd.f32 %v853, %v1037
    %v1039 = vpop.f32.mrb[0].mxu0
    %v1040 = vadd.f32 %v855, %v1039
    %1041 = vmatprep.mubr.f32.mxu0 %v370
    %1042 = vmatmul.mubr.f32.gmra.mrb[0].mxu0 %v369
    %v1043 = vpop.f32.mrb[0].mxu0
    %v1044 = vadd.f32 %v859, %v1043
    %v1045 = vpop.f32.mrb[0].mxu0
    %v1046 = vadd.f32 %v861, %v1045
    %1047 = vmatprep.mubr.f32.mxu0 %v378
    %1048 = vmatmul.mubr.f32.gmra.mrb[0].mxu0 %v377
    %v1049 = vpop.f32.mrb[0].mxu0
    %v1050 = vadd.f32 %v865, %v1049
    %v1051 = vpop.f32.mrb[0].mxu0
    %v1052 = vadd.f32 %v867, %v1051
    %1053 = vdwg.mxu0
    %1054 = vmatprep.subr.mxu0 %v512
    %1055 = vmatpush1.msra.mxu0 %v511
    %1056 = vmatprep.subr.mxu0 %v514
    %1057 = vmatpush1.msra.mxu0 %v513
    %1058 = vmatprep.subr.mxu0 %v516
    %1059 = vmatpush1.msra.mxu0 %v515
    %1060 = vmatprep.subr.mxu0 %v518
    %1061 = vmatpush1.msra.mxu0 %v517
    %1062 = vmatprep.subr.mxu0 %v520
    %1063 = vmatpush1.msra.mxu0 %v519
    %1064 = vmatprep.subr.mxu0 %v522
    %1065 = vmatpush1.msra.mxu0 %v521
    %1066 = vmatprep.subr.mxu0 %v524
    %1067 = vmatpush1.msra.mxu0 %v523
    %1068 = vmatprep.subr.mxu0 %v526
    %1069 = vmatpush1.msra.mxu0 %v525
    %1070 = vmatprep.subr.mxu0 %v528
    %1071 = vmatpush1.msra.mxu0 %v527
    %1072 = vmatprep.subr.mxu0 %v530
    %1073 = vmatpush1.msra.mxu0 %v529
    %1074 = vmatprep.subr.mxu0 %v532
    %1075 = vmatpush1.msra.mxu0 %v531
    %1076 = vmatprep.subr.mxu0 %v534
    %1077 = vmatpush1.msra.mxu0 %v533
    %1078 = vmatprep.subr.mxu0 %v536
    %1079 = vmatpush1.msra.mxu0 %v535
    %1080 = vmatprep.subr.mxu0 %v538
    %1081 = vmatpush1.msra.mxu0 %v537
    %1082 = vmatprep.subr.mxu0 %v540
    %1083 = vmatpush1.msra.mxu0 %v539
    %1084 = vmatprep.subr.mxu0 %v542
    %1085 = vmatpush1.msra.mxu0 %v541
    %1086 = vmatprep.subr.mxu0 %v544
    %1087 = vmatpush1.msra.mxu0 %v543
    %1088 = vmatprep.subr.mxu0 %v546
    %1089 = vmatpush1.msra.mxu0 %v545
    %1090 = vmatprep.subr.mxu0 %v548
    %1091 = vmatpush1.msra.mxu0 %v547
    %1092 = vmatprep.subr.mxu0 %v550
    %1093 = vmatpush1.msra.mxu0 %v549
    %1094 = vmatprep.subr.mxu0 %v552
    %1095 = vmatpush1.msra.mxu0 %v551
    %1096 = vmatprep.subr.mxu0 %v554
    %1097 = vmatpush1.msra.mxu0 %v553
    %1098 = vmatprep.subr.mxu0 %v556
    %1099 = vmatpush1.msra.mxu0 %v555
    %1100 = vmatprep.subr.mxu0 %v558
    %1101 = vmatpush1.msra.mxu0 %v557
    %1102 = vmatprep.subr.mxu0 %v560
    %1103 = vmatpush1.msra.mxu0 %v559
    %1104 = vmatprep.subr.mxu0 %v562
    %1105 = vmatpush1.msra.mxu0 %v561
    %1106 = vmatprep.subr.mxu0 %v564
    %1107 = vmatpush1.msra.mxu0 %v563
    %1108 = vmatprep.subr.mxu0 %v566
    %1109 = vmatpush1.msra.mxu0 %v565
    %1110 = vmatprep.subr.mxu0 %v568
    %1111 = vmatpush1.msra.mxu0 %v567
    %1112 = vmatprep.subr.mxu0 %v570
    %1113 = vmatpush1.msra.mxu0 %v569
    %1114 = vmatprep.subr.mxu0 %v572
    %1115 = vmatpush1.msra.mxu0 %v571
    %1116 = vmatprep.subr.mxu0 %v574
    %1117 = vmatpush1.msra.mxu0 %v573
    %1118 = vmatprep.mubr.f32.mxu0 %v228
    %1119 = vmatmul.mubr.f32.gmra.mrb[0].mxu0 %v227
    %v1120 = vpop.f32.mrb[0].mxu0
    %v1121 = vadd.f32 %v936, %v1120
    %v1122 = vpop.f32.mrb[0].mxu0
    %v1123 = vadd.f32 %v938, %v1122
    %1124 = vmatprep.mubr.f32.mxu0 %v236
    %1125 = vmatmul.mubr.f32.gmra.mrb[0].mxu0 %v235
    %v1126 = vpop.f32.mrb[0].mxu0
    %v1127 = vadd.f32 %v942, %v1126
    %v1128 = vpop.f32.mrb[0].mxu0
    %v1129 = vadd.f32 %v944, %v1128
    %1130 = vmatprep.mubr.f32.mxu0 %v244
    %1131 = vmatmul.mubr.f32.gmra.mrb[0].mxu0 %v243
    %v1132 = vpop.f32.mrb[0].mxu0
    %v1133 = vadd.f32 %v948, %v1132
    %v1134 = vpop.f32.mrb[0].mxu0
    %v1135 = vadd.f32 %v950, %v1134
    %1136 = vmatprep.mubr.f32.mxu0 %v252
    %1137 = vmatmul.mubr.f32.gmra.mrb[0].mxu0 %v251
    %v1138 = vpop.f32.mrb[0].mxu0
    %v1139 = vadd.f32 %v954, %v1138
    %v1140 = vpop.f32.mrb[0].mxu0
    %v1141 = vadd.f32 %v956, %v1140
    %1142 = vmatprep.mubr.f32.mxu0 %v260
    %1143 = vmatmul.mubr.f32.gmra.mrb[0].mxu0 %v259
    %v1144 = vpop.f32.mrb[0].mxu0
    %v1145 = vadd.f32 %v960, %v1144
    %v1146 = vpop.f32.mrb[0].mxu0
    %v1147 = vadd.f32 %v962, %v1146
    %1148 = vmatprep.mubr.f32.mxu0 %v268
    %1149 = vmatmul.mubr.f32.gmra.mrb[0].mxu0 %v267
    %v1150 = vpop.f32.mrb[0].mxu0
    %v1151 = vadd.f32 %v966, %v1150
    %v1152 = vpop.f32.mrb[0].mxu0
    %v1153 = vadd.f32 %v968, %v1152
    %1154 = vmatprep.mubr.f32.mxu0 %v276
    %1155 = vmatmul.mubr.f32.gmra.mrb[0].mxu0 %v275
    %v1156 = vpop.f32.mrb[0].mxu0
    %v1157 = vadd.f32 %v972, %v1156
    %v1158 = vpop.f32.mrb[0].mxu0
    %v1159 = vadd.f32 %v974, %v1158
    %1160 = vmatprep.mubr.f32.mxu0 %v284
    %1161 = vmatmul.mubr.f32.gmra.mrb[0].mxu0 %v283
    %v1162 = vpop.f32.mrb[0].mxu0
    %v1163 = vadd.f32 %v978, %v1162
    %v1164 = vpop.f32.mrb[0].mxu0
    %v1165 = vadd.f32 %v980, %v1164
    %1166 = vmatprep.mubr.f32.mxu0 %v292
    %1167 = vmatmul.mubr.f32.gmra.mrb[0].mxu0 %v291
    %v1168 = vpop.f32.mrb[0].mxu0
    %v1169 = vadd.f32 %v984, %v1168
    %v1170 = vpop.f32.mrb[0].mxu0
    %v1171 = vadd.f32 %v986, %v1170
    %1172 = vmatprep.mubr.f32.mxu0 %v300
    %1173 = vmatmul.mubr.f32.gmra.mrb[0].mxu0 %v299
    %v1174 = vpop.f32.mrb[0].mxu0
    %v1175 = vadd.f32 %v990, %v1174
    %v1176 = vpop.f32.mrb[0].mxu0
    %v1177 = vadd.f32 %v992, %v1176
    %1178 = vmatprep.mubr.f32.mxu0 %v308
    %1179 = vmatmul.mubr.f32.gmra.mrb[0].mxu0 %v307
    %v1180 = vpop.f32.mrb[0].mxu0
    %v1181 = vadd.f32 %v996, %v1180
    %v1182 = vpop.f32.mrb[0].mxu0
    %v1183 = vadd.f32 %v998, %v1182
    %1184 = vmatprep.mubr.f32.mxu0 %v316
    %1185 = vmatmul.mubr.f32.gmra.mrb[0].mxu0 %v315
    %v1186 = vpop.f32.mrb[0].mxu0
    %v1187 = vadd.f32 %v1002, %v1186
    %v1188 = vpop.f32.mrb[0].mxu0
    %v1189 = vadd.f32 %v1004, %v1188
    %1190 = vmatprep.mubr.f32.mxu0 %v324
    %1191 = vmatmul.mubr.f32.gmra.mrb[0].mxu0 %v323
    %v1192 = vpop.f32.mrb[0].mxu0
    %v1193 = vadd.f32 %v1008, %v1192
    %v1194 = vpop.f32.mrb[0].mxu0
    %v1195 = vadd.f32 %v1010, %v1194
    %1196 = vmatprep.mubr.f32.mxu0 %v332
    %1197 = vmatmul.mubr.f32.gmra.mrb[0].mxu0 %v331
    %v1198 = vpop.f32.mrb[0].mxu0
    %v1199 = vadd.f32 %v1014, %v1198
    %v1200 = vpop.f32.mrb[0].mxu0
    %v1201 = vadd.f32 %v1016, %v1200
    %1202 = vmatprep.mubr.f32.mxu0 %v340
    %1203 = vmatmul.mubr.f32.gmra.mrb[0].mxu0 %v339
    %v1204 = vpop.f32.mrb[0].mxu0
    %v1205 = vadd.f32 %v1020, %v1204
    %v1206 = vpop.f32.mrb[0].mxu0
    %v1207 = vadd.f32 %v1022, %v1206
    %1208 = vmatprep.mubr.f32.mxu0 %v348
    %1209 = vmatmul.mubr.f32.gmra.mrb[0].mxu0 %v347
    %v1210 = vpop.f32.mrb[0].mxu0
    %v1211 = vadd.f32 %v1026, %v1210
    %v1212 = vpop.f32.mrb[0].mxu0
    %v1213 = vadd.f32 %v1028, %v1212
    %1214 = vmatprep.mubr.f32.mxu0 %v356
    %1215 = vmatmul.mubr.f32.gmra.mrb[0].mxu0 %v355
    %v1216 = vpop.f32.mrb[0].mxu0
    %v1217 = vadd.f32 %v1032, %v1216
    %v1218 = vpop.f32.mrb[0].mxu0
    %v1219 = vadd.f32 %v1034, %v1218
    %1220 = vmatprep.mubr.f32.mxu0 %v364
    %1221 = vmatmul.mubr.f32.gmra.mrb[0].mxu0 %v363
    %v1222 = vpop.f32.mrb[0].mxu0
    %v1223 = vadd.f32 %v1038, %v1222
    %v1224 = vpop.f32.mrb[0].mxu0
    %v1225 = vadd.f32 %v1040, %v1224
    %1226 = vmatprep.mubr.f32.mxu0 %v372
    %1227 = vmatmul.mubr.f32.gmra.mrb[0].mxu0 %v371
    %v1228 = vpop.f32.mrb[0].mxu0
    %v1229 = vadd.f32 %v1044, %v1228
    %v1230 = vpop.f32.mrb[0].mxu0
    %v1231 = vadd.f32 %v1046, %v1230
    %1232 = vmatprep.mubr.f32.mxu0 %v380
    %1233 = vmatmul.mubr.f32.gmra.mrb[0].mxu0 %v379
    %v1234 = vpop.f32.mrb[0].mxu0
    %v1235 = vadd.f32 %v1050, %v1234
    %v1236 = vpop.f32.mrb[0].mxu0
    %v1237 = vadd.f32 %v1052, %v1236
    %1238 = vdwg.mxu0
    %1239 = vmatprep.subr.mxu0 %v576
    %1240 = vmatpush1.msra.mxu0 %v575
    %1241 = vmatprep.subr.mxu0 %v578
    %1242 = vmatpush1.msra.mxu0 %v577
    %1243 = vmatprep.subr.mxu0 %v580
    %1244 = vmatpush1.msra.mxu0 %v579
    %1245 = vmatprep.subr.mxu0 %v582
    %1246 = vmatpush1.msra.mxu0 %v581
    %1247 = vmatprep.subr.mxu0 %v584
    %1248 = vmatpush1.msra.mxu0 %v583
    %1249 = vmatprep.subr.mxu0 %v586
    %1250 = vmatpush1.msra.mxu0 %v585
    %1251 = vmatprep.subr.mxu0 %v588
    %1252 = vmatpush1.msra.mxu0 %v587
    %1253 = vmatprep.subr.mxu0 %v590
    %1254 = vmatpush1.msra.mxu0 %v589
    %1255 = vmatprep.subr.mxu0 %v592
    %1256 = vmatpush1.msra.mxu0 %v591
    %1257 = vmatprep.subr.mxu0 %v594
    %1258 = vmatpush1.msra.mxu0 %v593
    %1259 = vmatprep.subr.mxu0 %v596
    %1260 = vmatpush1.msra.mxu0 %v595
    %1261 = vmatprep.subr.mxu0 %v598
    %1262 = vmatpush1.msra.mxu0 %v597
    %1263 = vmatprep.subr.mxu0 %v600
    %1264 = vmatpush1.msra.mxu0 %v599
    %1265 = vmatprep.subr.mxu0 %v602
    %1266 = vmatpush1.msra.mxu0 %v601
    %1267 = vmatprep.subr.mxu0 %v604
    %1268 = vmatpush1.msra.mxu0 %v603
    %1269 = vmatprep.subr.mxu0 %v606
    %1270 = vmatpush1.msra.mxu0 %v605
    %1271 = vmatprep.subr.mxu0 %v608
    %1272 = vmatpush1.msra.mxu0 %v607
    %1273 = vmatprep.subr.mxu0 %v610
    %1274 = vmatpush1.msra.mxu0 %v609
    %1275 = vmatprep.subr.mxu0 %v612
    %1276 = vmatpush1.msra.mxu0 %v611
    %1277 = vmatprep.subr.mxu0 %v614
    %1278 = vmatpush1.msra.mxu0 %v613
    %1279 = vmatprep.subr.mxu0 %v616
    %1280 = vmatpush1.msra.mxu0 %v615
    %1281 = vmatprep.subr.mxu0 %v618
    %1282 = vmatpush1.msra.mxu0 %v617
    %1283 = vmatprep.subr.mxu0 %v620
    %1284 = vmatpush1.msra.mxu0 %v619
    %1285 = vmatprep.subr.mxu0 %v622
    %1286 = vmatpush1.msra.mxu0 %v621
    %1287 = vmatprep.subr.mxu0 0.0
    %1288 = vmatpush1.msra.mxu0 0.0
    %1289 = vmatprep.subr.mxu0 0.0
    %1290 = vmatpush1.msra.mxu0 0.0
    %1291 = vmatprep.subr.mxu0 0.0
    %1292 = vmatpush1.msra.mxu0 0.0
    %1293 = vmatprep.subr.mxu0 0.0
    %1294 = vmatpush1.msra.mxu0 0.0
    %1295 = vmatprep.subr.mxu0 0.0
    %1296 = vmatpush1.msra.mxu0 0.0
    %1297 = vmatprep.subr.mxu0 0.0
    %1298 = vmatpush1.msra.mxu0 0.0
    %1299 = vmatprep.subr.mxu0 0.0
    %1300 = vmatpush1.msra.mxu0 0.0
    %1301 = vmatprep.subr.mxu0 0.0
    %1302 = vmatpush1.msra.mxu0 0.0
    %1303 = vmatprep.mubr.f32.mxu0 %v625
    %1304 = vmatmul.mubr.f32.gmra.mrb[0].mxu0 %v229
    %v1305 = vpop.f32.mrb[0].mxu0
    %v1306 = vadd.f32 %v1121, %v1305
    %v1307 = vpop.f32.mrb[0].mxu0
    %v1308 = vadd.f32 %v1123, %v1307
    %1309 = vmatprep.mubr.f32.mxu0 %v628
    %1310 = vmatmul.mubr.f32.gmra.mrb[0].mxu0 %v237
    %v1311 = vpop.f32.mrb[0].mxu0
    %v1312 = vadd.f32 %v1127, %v1311
    %v1313 = vpop.f32.mrb[0].mxu0
    %v1314 = vadd.f32 %v1129, %v1313
    %1315 = vmatprep.mubr.f32.mxu0 %v631
    %1316 = vmatmul.mubr.f32.gmra.mrb[0].mxu0 %v245
    %v1317 = vpop.f32.mrb[0].mxu0
    %v1318 = vadd.f32 %v1133, %v1317
    %v1319 = vpop.f32.mrb[0].mxu0
    %v1320 = vadd.f32 %v1135, %v1319
    %1321 = vmatprep.mubr.f32.mxu0 %v634
    %1322 = vmatmul.mubr.f32.gmra.mrb[0].mxu0 %v253
    %v1323 = vpop.f32.mrb[0].mxu0
    %v1324 = vadd.f32 %v1139, %v1323
    %v1325 = vpop.f32.mrb[0].mxu0
    %v1326 = vadd.f32 %v1141, %v1325
    %1327 = vmatprep.mubr.f32.mxu0 %v637
    %1328 = vmatmul.mubr.f32.gmra.mrb[0].mxu0 %v261
    %v1329 = vpop.f32.mrb[0].mxu0
    %v1330 = vadd.f32 %v1145, %v1329
    %v1331 = vpop.f32.mrb[0].mxu0
    %v1332 = vadd.f32 %v1147, %v1331
    %1333 = vmatprep.mubr.f32.mxu0 %v640
    %1334 = vmatmul.mubr.f32.gmra.mrb[0].mxu0 %v269
    %v1335 = vpop.f32.mrb[0].mxu0
    %v1336 = vadd.f32 %v1151, %v1335
    %v1337 = vpop.f32.mrb[0].mxu0
    %v1338 = vadd.f32 %v1153, %v1337
    %1339 = vmatprep.mubr.f32.mxu0 %v643
    %1340 = vmatmul.mubr.f32.gmra.mrb[0].mxu0 %v277
    %v1341 = vpop.f32.mrb[0].mxu0
    %v1342 = vadd.f32 %v1157, %v1341
    %v1343 = vpop.f32.mrb[0].mxu0
    %v1344 = vadd.f32 %v1159, %v1343
    %1345 = vmatprep.mubr.f32.mxu0 %v646
    %1346 = vmatmul.mubr.f32.gmra.mrb[0].mxu0 %v285
    %v1347 = vpop.f32.mrb[0].mxu0
    %v1348 = vadd.f32 %v1163, %v1347
    %v1349 = vpop.f32.mrb[0].mxu0
    %v1350 = vadd.f32 %v1165, %v1349
    %1351 = vmatprep.mubr.f32.mxu0 %v649
    %1352 = vmatmul.mubr.f32.gmra.mrb[0].mxu0 %v293
    %v1353 = vpop.f32.mrb[0].mxu0
    %v1354 = vadd.f32 %v1169, %v1353
    %v1355 = vpop.f32.mrb[0].mxu0
    %v1356 = vadd.f32 %v1171, %v1355
    %1357 = vmatprep.mubr.f32.mxu0 %v652
    %1358 = vmatmul.mubr.f32.gmra.mrb[0].mxu0 %v301
    %v1359 = vpop.f32.mrb[0].mxu0
    %v1360 = vadd.f32 %v1175, %v1359
    %v1361 = vpop.f32.mrb[0].mxu0
    %v1362 = vadd.f32 %v1177, %v1361
    %1363 = vmatprep.mubr.f32.mxu0 %v655
    %1364 = vmatmul.mubr.f32.gmra.mrb[0].mxu0 %v309
    %v1365 = vpop.f32.mrb[0].mxu0
    %v1366 = vadd.f32 %v1181, %v1365
    %v1367 = vpop.f32.mrb[0].mxu0
    %v1368 = vadd.f32 %v1183, %v1367
    %1369 = vmatprep.mubr.f32.mxu0 %v658
    %1370 = vmatmul.mubr.f32.gmra.mrb[0].mxu0 %v317
    %v1371 = vpop.f32.mrb[0].mxu0
    %v1372 = vadd.f32 %v1187, %v1371
    %v1373 = vpop.f32.mrb[0].mxu0
    %v1374 = vadd.f32 %v1189, %v1373
    %1375 = vmatprep.mubr.f32.mxu0 %v661
    %1376 = vmatmul.mubr.f32.gmra.mrb[0].mxu0 %v325
    %v1377 = vpop.f32.mrb[0].mxu0
    %v1378 = vadd.f32 %v1193, %v1377
    %v1379 = vpop.f32.mrb[0].mxu0
    %v1380 = vadd.f32 %v1195, %v1379
    %1381 = vmatprep.mubr.f32.mxu0 %v664
    %1382 = vmatmul.mubr.f32.gmra.mrb[0].mxu0 %v333
    %v1383 = vpop.f32.mrb[0].mxu0
    %v1384 = vadd.f32 %v1199, %v1383
    %v1385 = vpop.f32.mrb[0].mxu0
    %v1386 = vadd.f32 %v1201, %v1385
    %1387 = vmatprep.mubr.f32.mxu0 %v667
    %1388 = vmatmul.mubr.f32.gmra.mrb[0].mxu0 %v341
    %v1389 = vpop.f32.mrb[0].mxu0
    %v1390 = vadd.f32 %v1205, %v1389
    %v1391 = vpop.f32.mrb[0].mxu0
    %v1392 = vadd.f32 %v1207, %v1391
    %1393 = vmatprep.mubr.f32.mxu0 %v670
    %1394 = vmatmul.mubr.f32.gmra.mrb[0].mxu0 %v349
    %v1395 = vpop.f32.mrb[0].mxu0
    %v1396 = vadd.f32 %v1211, %v1395
    %v1397 = vpop.f32.mrb[0].mxu0
    %v1398 = vadd.f32 %v1213, %v1397
    %1399 = vmatprep.mubr.f32.mxu0 %v673
    %1400 = vmatmul.mubr.f32.gmra.mrb[0].mxu0 %v357
    %v1401 = vpop.f32.mrb[0].mxu0
    %v1402 = vadd.f32 %v1217, %v1401
    %v1403 = vpop.f32.mrb[0].mxu0
    %v1404 = vadd.f32 %v1219, %v1403
    %1405 = vmatprep.mubr.f32.mxu0 %v676
    %1406 = vmatmul.mubr.f32.gmra.mrb[0].mxu0 %v365
    %v1407 = vpop.f32.mrb[0].mxu0
    %v1408 = vadd.f32 %v1223, %v1407
    %v1409 = vpop.f32.mrb[0].mxu0
    %v1410 = vadd.f32 %v1225, %v1409
    %1411 = vmatprep.mubr.f32.mxu0 %v679
    %1412 = vmatmul.mubr.f32.gmra.mrb[0].mxu0 %v373
    %v1413 = vpop.f32.mrb[0].mxu0
    %v1414 = vadd.f32 %v1229, %v1413
    %v1415 = vpop.f32.mrb[0].mxu0
    %v1416 = vadd.f32 %v1231, %v1415
    %1417 = vmatprep.mubr.f32.mxu0 %v682
    %1418 = vmatmul.mubr.f32.gmra.mrb[0].mxu0 %v381
    %v1419 = vpop.f32.mrb[0].mxu0
    %v1420 = vadd.f32 %v1235, %v1419
    %v1421 = vpop.f32.mrb[0].mxu0
    %v1422 = vadd.f32 %v1237, %v1421
    %1423 = vdwg.mxu0
    %1424 = vst [vmem:[#allocation2] sm:$0xff] %v1306
    %vm1425 = vcmask 556032
    %1426 = vst.msk [vmem:[#allocation2 + $0x8] sm:$0xff] %vm1425, %v1308
    %1427 = vst [vmem:[#allocation2 + $0x10] sm:$0xff] %v1312
    %1428 = vst.msk [vmem:[#allocation2 + $0x18] sm:$0xff] %vm1425, %v1314
    %1429 = vst [vmem:[#allocation2 + $0x20] sm:$0xff] %v1318
    %1430 = vst.msk [vmem:[#allocation2 + $0x28] sm:$0xff] %vm1425, %v1320
    %1431 = vst [vmem:[#allocation2 + $0x30] sm:$0xff] %v1324
    %1432 = vst.msk [vmem:[#allocation2 + $0x38] sm:$0xff] %vm1425, %v1326
    %1433 = vst [vmem:[#allocation2 + $0x40] sm:$0xff] %v1330
    %1434 = vst.msk [vmem:[#allocation2 + $0x48] sm:$0xff] %vm1425, %v1332
    %1435 = vst [vmem:[#allocation2 + $0x50] sm:$0xff] %v1336
    %1436 = vst.msk [vmem:[#allocation2 + $0x58] sm:$0xff] %vm1425, %v1338
    %1437 = vst [vmem:[#allocation2 + $0x60] sm:$0xff] %v1342
    %1438 = vst.msk [vmem:[#allocation2 + $0x68] sm:$0xff] %vm1425, %v1344
    %1439 = vst [vmem:[#allocation2 + $0x70] sm:$0xff] %v1348
    %1440 = vst.msk [vmem:[#allocation2 + $0x78] sm:$0xff] %vm1425, %v1350
    %1441 = vst [vmem:[#allocation2 + $0x80] sm:$0xff] %v1354
    %1442 = vst.msk [vmem:[#allocation2 + $0x88] sm:$0xff] %vm1425, %v1356
    %1443 = vst [vmem:[#allocation2 + $0x90] sm:$0xff] %v1360
    %1444 = vst.msk [vmem:[#allocation2 + $0x98] sm:$0xff] %vm1425, %v1362
    %1445 = vst [vmem:[#allocation2 + $0xa0] sm:$0xff] %v1366
    %1446 = vst.msk [vmem:[#allocation2 + $0xa8] sm:$0xff] %vm1425, %v1368
    %1447 = vst [vmem:[#allocation2 + $0xb0] sm:$0xff] %v1372
    %1448 = vst.msk [vmem:[#allocation2 + $0xb8] sm:$0xff] %vm1425, %v1374
    %1449 = vst [vmem:[#allocation2 + $0xc0] sm:$0xff] %v1378
    %1450 = vst.msk [vmem:[#allocation2 + $0xc8] sm:$0xff] %vm1425, %v1380
    %1451 = vst [vmem:[#allocation2 + $0xd0] sm:$0xff] %v1384
    %1452 = vst.msk [vmem:[#allocation2 + $0xd8] sm:$0xff] %vm1425, %v1386
    %1453 = vst [vmem:[#allocation2 + $0xe0] sm:$0xff] %v1390
    %1454 = vst.msk [vmem:[#allocation2 + $0xe8] sm:$0xff] %vm1425, %v1392
    %1455 = vst [vmem:[#allocation2 + $0xf0] sm:$0xff] %v1396
    %1456 = vst.msk [vmem:[#allocation2 + $0xf8] sm:$0xff] %vm1425, %v1398
    %1457 = vst [vmem:[#allocation2 + $0x100] sm:$0xff] %v1402
    %1458 = vst.msk [vmem:[#allocation2 + $0x108] sm:$0xff] %vm1425, %v1404
    %1459 = vst [vmem:[#allocation2 + $0x110] sm:$0xff] %v1408
    %1460 = vst.msk [vmem:[#allocation2 + $0x118] sm:$0xff] %vm1425, %v1410
    %1461 = vst [vmem:[#allocation2 + $0x120] sm:$0xff] %v1414
    %1462 = vst.msk [vmem:[#allocation2 + $0x128] sm:$0xff] %vm1425, %v1416
    %1463 = vst [vmem:[#allocation2 + $0x130] sm:$0xff] %v1420
    %1464 = vst.msk [vmem:[#allocation2 + $0x138] sm:$0xff] %vm1425, %v1422
    // Predicated region
    $region14: #{tpu_custom_call.1} parent=1 // pred_check
      _
    $region15: #{tpu_custom_call.1} parent=1 // pred_check_branch
      %1466 = sbr.rel (0) target = $region17
    $region16: #{tpu_custom_call.1} parent=1 // pred_region
      %s1468 = ssub.s32 5120, 5120
      %1469 = vsyncadd [#allocation3], %s1468
      %s1470 = sshll.u32 [#allocation2], 4
      %s1471 = int_to_ptr.vmem [resolvable:$true] %s1470
      %1476 = dma.vmem_to_hbm [thread:$0]  %s1471, 5120, %s3, [#allocation3], 256, 256, 16
    $region17: #{tpu_custom_call.1} parent=1 // pred_fallthru
      _
    // Predicated region
    $region18: #{tpu_custom_call.1} parent=1 // pred_check
      _
    $region19: #{tpu_custom_call.1} parent=1 // pred_check_branch
      %1478 = sbr.rel (0) target = $region21
    $region20: #{tpu_custom_call.1} parent=1 // pred_region
      %1479 = dma.done [#allocation3], 5120
    $region21: #{tpu_custom_call.1} parent=1 // pred_fallthru
      _
    %1480 = vsyncpa [#allocation3], 1

</llo_original>
